<compile_context>
chip_gen: v7x
topology: tpu7x:2x2x1
jax: 0.10.0
libtpu: 0.0.40
codegen_flags: <defaults>
</compile_context>

<pallas_src>
import jax
import jax.numpy as jnp
from jax.experimental import pallas as pl
from jax.experimental.pallas import tpu as pltpu


# ----------------------------- Pallas kernel --------------------------------
def svuld_head_kernel(emb_ref, poolw_ref, wcls_ref, b_ref, labels_ref,
                      out_ref, acc_ref):
    """Tiled masked-mean pooling + classifier + softmax + per-sample CE.

    Grid = (B // tb [parallel], S // ts [arbitrary / reduction, last]).

    emb_ref    : [tb, ts, H] bf16/f32  encoder token embeddings tile
    poolw_ref  : [tb, ts]    f32       mask / mask.sum(-1)  (1/denom pre-folded)
    wcls_ref   : [2, H]      f32       classifier weight (nn.Linear layout [out, in])
    b_ref      : [1, 2]      f32       classifier bias
    labels_ref : [tb, 1]     i32       class labels for this batch block
    out_ref    : [tb, 128]   f32       packed lane-dense output:
                                       col0 = per-sample CE, col1..2 = softmax probs
    acc_ref    : [tb, H]     f32       pooled-sum accumulator (VMEM scratch)
    """
    k = pl.program_id(1)

    @pl.when(k == 0)
    def _init():
        acc_ref[...] = jnp.zeros_like(acc_ref)

    # Masked, pre-normalized mean pooling as a batched MXU mat-vec:
    #   acc[b, :] += sum_s poolw[b, s] * emb[b, s, :]
    # poolw stays f32 (tight numerics); emb upcast once per tile.  The tiny
    # value-level expand/squeeze keeps the accumulator/poolw *refs* dense.
    w = poolw_ref[...]                                       # [tb, ts]
    w3 = w.reshape(w.shape[0], 1, w.shape[1])                # [tb, 1, ts]
    emb = emb_ref[...].astype(jnp.float32)                   # [tb, ts, H]
    contrib = jnp.einsum("bks,bsh->bkh", w3, emb,
                         preferred_element_type=jnp.float32)  # [tb, 1, H]
    acc_ref[...] += contrib.reshape(contrib.shape[0], contrib.shape[2])

    @pl.when(k == pl.num_programs(1) - 1)
    def _finalize():
        pooled = acc_ref[...]                                # [tb, H] f32
        wc = wcls_ref[...]                                   # [2, H]
        bias = b_ref[...]                                    # [1, 2]

        # logits = pooled @ W.T + b, with N=2 done as two VPU/XLU dot products
        z0 = jnp.sum(pooled * wc[0:1, :], axis=-1, keepdims=True) + bias[:, 0:1]
        z1 = jnp.sum(pooled * wc[1:2, :], axis=-1, keepdims=True) + bias[:, 1:2]

        # softmax + log-softmax (numerically stable, all f32)
        m = jnp.maximum(z0, z1)
        e0 = jnp.exp(z0 - m)
        e1 = jnp.exp(z1 - m)
        zsum = e0 + e1
        inv_z = pl.reciprocal(zsum)          # exact; approx=True ~1e-3 err
        p0 = e0 * inv_z
        p1 = e1 * inv_z

        logz = jnp.log(zsum)
        lp0 = (z0 - m) - logz
        lp1 = (z1 - m) - logz
        lab = labels_ref[...]                                # [tb, 1] i32
        nll = -jnp.where(lab == 0, lp0, lp1)                 # [tb, 1]

        # Pack [nll, p0, p1, 0, ...] into one lane-dense row (unmasked vst).
        col = jax.lax.broadcasted_iota(
            jnp.int32, (nll.shape[0], out_ref.shape[-1]), 1)
        out_ref[...] = jnp.where(
            col == 0, nll,
            jnp.where(col == 1, p0,
                      jnp.where(col == 2, p1, jnp.float32(0.0))))


# --------------------------- tiling / VMEM heuristics ------------------------
def _vmem_limit_bytes():
    """Scoped-VMEM limit: ~75% of physical VMEM, capped at 100 MiB.
    v7x (64 MiB) -> 48 MiB; v5e/v6e (128 MiB) -> 96 MiB."""
    cap = 64 * 1024 * 1024          # conservative default = v7x physical VMEM
    try:
        info = pltpu.get_tpu_info()
        cap = int(getattr(info, "vmem_capacity_bytes", cap) or cap)
    except Exception:
        pass
    return int(min(cap * 3 // 4, 100 * 1024 * 1024))


def _divisor_tiles(total, step):
    """Divisors of `total` that are multiples of `step`, plus `total`, descending."""
    cands = {total}
    t = step
    while t < total:
        if total % t == 0:
            cands.add(t)
        t += step
    return sorted(cands, reverse=True)


def _pick_tiles(B, S, H, emb_itemsize, vmem_limit_bytes):
    """Largest (tb, ts) whose double-buffered inputs + f32 accumulator fit in
    ~60% of the scoped-VMEM budget.  Prefer ts == S (collapses the reduction
    axis), then the largest tb; finally prefer >= 2 batch blocks so the
    "parallel" axis can be sharded across v7x's two TensorCores."""
    budget = int(vmem_limit_bytes * 0.6)

    def cost(tb, ts):
        emb = 2 * tb * ts * H * emb_itemsize      # double-buffered emb tile
        poolw = 2 * tb * ts * 4                   # double-buffered f32 pool weights
        acc = tb * H * 4                          # f32 accumulator scratch
        misc = 2 * (tb * 128 * 4 + 2 * H * 4 + 2 * 4 + tb * 4)  # out/W/b/labels
        return emb + poolw + acc + misc

    batch_tiles = _divisor_tiles(B, 8) if B % 8 == 0 else [B]
    seq_tiles = _divisor_tiles(S, 128) if S % 128 == 0 else [S]

    best = None
    for ts in seq_tiles:                 # largest ts first (prefer ts == S)
        for tb in batch_tiles:           # then largest tb
            if cost(tb, ts) <= budget:
                best = (tb, ts)
                break
        if best is not None:
            break
    if best is None:                     # fall back to smallest legal tiles
        best = (batch_tiles[-1], seq_tiles[-1])

    tb, ts = best
    # v7x megacore: prefer >= 2 blocks on the parallel (batch) axis if possible.
    if B // tb < 2:
        for smaller in batch_tiles:
            if smaller < tb and B // smaller >= 2 and cost(smaller, ts) <= budget:
                tb = smaller
                break
    return tb, ts


# ------------------------------ host wrapper ---------------------------------
def svuld_forward(token_embeddings, mask, w_cls, b, labels, *, tb=None, ts=None):
    """loss, prob  for the SVulD head.  token_embeddings is consumed in its
    native dtype (bf16 straight from the encoder — no wrapper-side cast pass)."""
    B, S, H = token_embeddings.shape

    vmem_limit = _vmem_limit_bytes()
    auto_tb, auto_ts = _pick_tiles(
        B, S, H, jnp.dtype(token_embeddings.dtype).itemsize, vmem_limit)
    tb = auto_tb if tb is None else tb
    ts = auto_ts if ts is None else ts
    # (8,128) rule on the last two dims of each BlockSpec.
    assert B % tb == 0 and (tb == B or tb % 8 == 0), (B, tb)
    assert S % ts == 0 and (ts == S or ts % 128 == 0), (S, ts)

    denom = jnp.sum(mask, axis=1, keepdims=True)              # [B, 1]
    poolw = mask.astype(jnp.float32) / denom                  # [B, S] f32 (tiny)
    labels2 = labels.reshape(B, 1).astype(jnp.int32)
    w2 = w_cls.astype(jnp.float32)                            # [2, H]
    b2 = b.reshape(1, 2).astype(jnp.float32)

    grid = (B // tb, S // ts)
    out = pl.pallas_call(
        svuld_head_kernel,
        out_shape=jax.ShapeDtypeStruct((B, 128), jnp.float32),
        grid_spec=pltpu.PrefetchScalarGridSpec(
            num_scalar_prefetch=0,
            grid=grid,
            in_specs=[
                pl.BlockSpec((tb, ts, H), lambda i, k: (i, k, 0)),   # emb (native dtype)
                pl.BlockSpec((tb, ts),    lambda i, k: (i, k)),      # pool weights f32
                pl.BlockSpec((2, H),      lambda i, k: (0, 0)),      # classifier W
                pl.BlockSpec((1, 2),      lambda i, k: (0, 0)),      # classifier b
                pl.BlockSpec((tb, 1),     lambda i, k: (i, 0)),      # labels
            ],
            out_specs=pl.BlockSpec((tb, 128), lambda i, k: (i, 0)),  # packed output
            scratch_shapes=[pltpu.VMEM((tb, H), jnp.float32)],       # pooled acc
        ),
        compiler_params=pltpu.CompilerParams(
            dimension_semantics=("parallel", "arbitrary"),
            vmem_limit_bytes=vmem_limit,
        ),
    )(token_embeddings, poolw, w2, b2, labels2)

    nll = out[:, 0]                      # per-sample CE
    prob = out[:, 1:3]                   # softmax probabilities
    # F.cross_entropy(..., reduction='mean'): batch axis is parallel-tiled
    # across cores, so the (trivial) mean over B happens outside the kernel.
    loss = jnp.mean(nll)
    return loss, prob


# --------------------------- glue / stand-in encoder -------------------------
def standin_encoder(input_ids, embed_table, proj):
    """Deterministic stand-in for the external transformer encoder (glue).
    Emits bf16 directly so the kernel reads bf16 from HBM without an extra
    wrapper-side cast pass."""
    tok = embed_table[input_ids]                 # [B, S, H]
    return jnp.tanh(tok @ proj).astype(jnp.bfloat16)


# ------------------------------ reference (JAX) -------------------------------
def reference_forward(token_embeddings, mask, w_cls, b, labels):
    """Pure-JAX reference with the same bf16-encoder / f32-math semantics."""
    emb = token_embeddings.astype(jnp.float32)                # [B, S, H]
    denom = jnp.sum(mask, axis=1, keepdims=True)
    poolw = mask.astype(jnp.float32) / denom                  # [B, S]
    pooled = jnp.sum(poolw[:, :, None] * emb, axis=1)         # [B, H] f32 exact
    l0 = jnp.sum(pooled * w_cls[0], axis=-1) + b[0]
    l1 = jnp.sum(pooled * w_cls[1], axis=-1) + b[1]
    logits = jnp.stack([l0, l1], axis=-1)                     # [B, 2]
    prob = jax.nn.softmax(logits, axis=-1)
    logp = jax.nn.log_softmax(logits, axis=-1)
    nll = -jnp.take_along_axis(
        logp, labels.reshape(-1, 1).astype(jnp.int32), axis=-1)[:, 0]
    return nll.mean(), prob


if __name__ == "__main__":
    key = jax.random.PRNGKey(0)
    B, S, H, vocab = 16, 256, 128, 101
    pad_token_id = 0

    k1, k2, k3, k4, k5, k6 = jax.random.split(key, 6)

    # deterministic "tokenized" inputs with trailing padding (every row non-empty)
    input_ids = jax.random.randint(k1, (B, S), 1, vocab)
    lens = [S - ((r * 29) % 128) for r in range(B)]
    for r in range(B):
        if lens[r] < S:
            input_ids = input_ids.at[r, lens[r]:].set(pad_token_id)
    labels = jax.random.randint(k2, (B,), 0, 2).astype(jnp.int32)

    # stand-in encoder params
    embed_table = jax.random.normal(k3, (vocab, H), dtype=jnp.float32) * 0.1
    proj = jax.random.normal(k4, (H, H), dtype=jnp.float32) * 0.1

    # classifier params: nn.Linear(hidden_size, 2)  (weight [2, H], bias [2])
    w_cls = jax.random.normal(k5, (2, H), dtype=jnp.float32) * 0.1
    b_cls = jax.random.normal(k6, (2,), dtype=jnp.float32) * 0.1

    # forward
    mask = (input_ids != pad_token_id).astype(jnp.float32)            # [B, S]
    token_embeddings = standin_encoder(input_ids, embed_table, proj)  # [B, S, H] bf16

    fwd = jax.jit(svuld_forward)
    loss, prob = fwd(token_embeddings, mask, w_cls, b_cls, labels)
    jax.block_until_ready((loss, prob))

    ref_loss, ref_prob = reference_forward(token_embeddings, mask, w_cls, b_cls,
                                           labels)
    assert jnp.allclose(loss, ref_loss, atol=1e-4, rtol=1e-4), (loss, ref_loss)
    assert jnp.allclose(prob, ref_prob, atol=1e-4, rtol=1e-4)

    print("KERNEL_OK")
</pallas_src>

<mosaic_0001>
module attributes {stable_mosaic.version = 11 : i64} {
  func.func @svuld_head_kernel(%arg0: i32, %arg1: i32, %arg2: memref<8x256x128xbf16, #tpu.memory_space<vmem>>, %arg3: memref<8x256xf32, #tpu.memory_space<vmem>>, %arg4: memref<2x128xf32, #tpu.memory_space<vmem>>, %arg5: memref<1x2xf32, #tpu.memory_space<vmem>>, %arg6: memref<8x1xi32, #tpu.memory_space<vmem>>, %arg7: memref<8x128xf32, #tpu.memory_space<vmem>>, %arg8: memref<8x128xf32, #tpu.memory_space<vmem>>) attributes {dimension_semantics = [#tpu.dimension_semantics<parallel>, #tpu.dimension_semantics<arbitrary>], iteration_bounds = array<i64: 2, 1>, scalar_prefetch = 0 : i64, scratch_operands = 1 : i64, tpu.core_type = #tpu.core_type<tc>, window_params = [{transform_indices = @transform_0, window_bounds = array<i64: 8, 256, 128>}, {transform_indices = @transform_1, window_bounds = array<i64: 8, 256>}, {pipeline_mode = #tpu.pipeline_mode<synchronous>, transform_indices = @transform_2, window_bounds = array<i64: 2, 128>}, {pipeline_mode = #tpu.pipeline_mode<synchronous>, transform_indices = @transform_3, window_bounds = array<i64: 1, 2>}, {transform_indices = @transform_4, window_bounds = array<i64: 8, 1>}, {transform_indices = @transform_5, window_bounds = array<i64: 8, 128>}]} {
    %c0_i32 = arith.constant 0 : i32
    %0 = arith.cmpi eq, %arg1, %c0_i32 : i32
    %1 = arith.extui %0 : i1 to i32
    %c0_i32_0 = arith.constant 0 : i32
    %2 = arith.cmpi ne, %1, %c0_i32_0 : i32
    scf.if %2 {
      %cst_11 = arith.constant 0.000000e+00 : f32
      %15 = vector.broadcast %cst_11 : f32 to vector<8x128xf32>
      %c0_12 = arith.constant 0 : index
      %c0_13 = arith.constant 0 : index
      %16 = vector.load %arg8[%c0_12, %c0_13] : memref<8x128xf32, #tpu.memory_space<vmem>>, vector<8x128xf32>
      tpu.vector_store %arg8[%c0_12, %c0_13], %15 {strides = array<i32>} : memref<8x128xf32, #tpu.memory_space<vmem>>, vector<8x128xf32>,
    } else {
    }
    %c0 = arith.constant 0 : index
    %c0_1 = arith.constant 0 : index
    %3 = vector.load %arg3[%c0, %c0_1] : memref<8x256xf32, #tpu.memory_space<vmem>>, vector<8x256xf32>
    %4 = vector.shape_cast %3 : vector<8x256xf32> to vector<8x1x256xf32>
    %c0_2 = arith.constant 0 : index
    %c0_3 = arith.constant 0 : index
    %c0_4 = arith.constant 0 : index
    %5 = vector.load %arg2[%c0_2, %c0_3, %c0_4] : memref<8x256x128xbf16, #tpu.memory_space<vmem>>, vector<8x256x128xbf16>
    %6 = arith.extf %5 : vector<8x256x128xbf16> to vector<8x256x128xf32>
    "tpu.trace_start"() <{level = 10 : i32, message = "bks,bsh->bkh"}> : () -> ()
    %cst = arith.constant dense<0.000000e+00> : vector<8x1x128xf32>
    %7 = tpu.matmul %4, %6, %cst {dimension_numbers = #tpu.dot_dimension_numbers<[2], [1], [1], [2], [0, 0, 0, 1, 1, 2], [0], [0]>} : vector<8x1x256xf32>, vector<8x256x128xf32>, vector<8x1x128xf32> -> vector<8x1x128xf32>
    "tpu.trace_stop"() : () -> ()
    %c0_5 = arith.constant 0 : index
    %c0_6 = arith.constant 0 : index
    %8 = vector.load %arg8[%c0_5, %c0_6] : memref<8x128xf32, #tpu.memory_space<vmem>>, vector<8x128xf32>
    %9 = vector.shape_cast %7 : vector<8x1x128xf32> to vector<8x128xf32>
    %10 = arith.addf %8, %9 : vector<8x128xf32>
    %c0_7 = arith.constant 0 : index
    %c0_8 = arith.constant 0 : index
    %11 = vector.load %arg8[%c0_7, %c0_8] : memref<8x128xf32, #tpu.memory_space<vmem>>, vector<8x128xf32>
    tpu.vector_store %arg8[%c0_7, %c0_8], %10 {strides = array<i32>} : memref<8x128xf32, #tpu.memory_space<vmem>>, vector<8x128xf32>,
    %c0_i32_9 = arith.constant 0 : i32
    %12 = arith.cmpi eq, %arg1, %c0_i32_9 : i32
    %13 = arith.extui %12 : i1 to i32
    %c0_i32_10 = arith.constant 0 : i32
    %14 = arith.cmpi ne, %13, %c0_i32_10 : i32
    scf.if %14 {
      %c0_11 = arith.constant 0 : index
      %c0_12 = arith.constant 0 : index
      %15 = vector.load %arg8[%c0_11, %c0_12] : memref<8x128xf32, #tpu.memory_space<vmem>>, vector<8x128xf32>
      %c0_13 = arith.constant 0 : index
      %c0_14 = arith.constant 0 : index
      %16 = vector.load %arg4[%c0_13, %c0_14] : memref<2x128xf32, #tpu.memory_space<vmem>>, vector<2x128xf32>
      %c0_15 = arith.constant 0 : index
      %c0_16 = arith.constant 0 : index
      %17 = vector.load %arg5[%c0_15, %c0_16] : memref<1x2xf32, #tpu.memory_space<vmem>>, vector<1x2xf32>
      %18 = vector.extract_strided_slice %16 {offsets = [0, 0], sizes = [1, 128], strides = [1, 1]} : vector<2x128xf32> to vector<1x128xf32>
      %19 = vector.broadcast %18 : vector<1x128xf32> to vector<8x128xf32>
      %20 = arith.mulf %15, %19 : vector<8x128xf32>
      %cst_17 = arith.constant dense<0.000000e+00> : vector<8xf32>
      %21 = vector.multi_reduction <add>, %20, %cst_17 [1] : vector<8x128xf32> to vector<8xf32>
      %22 = vector.shape_cast %21 : vector<8xf32> to vector<8x1xf32>
      %23 = vector.extract_strided_slice %17 {offsets = [0, 0], sizes = [1, 1], strides = [1, 1]} : vector<1x2xf32> to vector<1x1xf32>
      %24 = vector.broadcast %23 : vector<1x1xf32> to vector<8x1xf32>
      %25 = arith.addf %22, %24 : vector<8x1xf32>
      %26 = vector.extract_strided_slice %16 {offsets = [1, 0], sizes = [1, 128], strides = [1, 1]} : vector<2x128xf32> to vector<1x128xf32>
      %27 = vector.broadcast %26 : vector<1x128xf32> to vector<8x128xf32>
      %28 = arith.mulf %15, %27 : vector<8x128xf32>
      %cst_18 = arith.constant dense<0.000000e+00> : vector<8xf32>
      %29 = vector.multi_reduction <add>, %28, %cst_18 [1] : vector<8x128xf32> to vector<8xf32>
      %30 = vector.shape_cast %29 : vector<8xf32> to vector<8x1xf32>
      %31 = vector.extract_strided_slice %17 {offsets = [0, 1], sizes = [1, 1], strides = [1, 1]} : vector<1x2xf32> to vector<1x1xf32>
      %32 = vector.broadcast %31 : vector<1x1xf32> to vector<8x1xf32>
      %33 = arith.addf %30, %32 : vector<8x1xf32>
      %34 = arith.maximumf %25, %33 : vector<8x1xf32>
      %35 = arith.subf %25, %34 : vector<8x1xf32>
      %36 = math.exp %35 : vector<8x1xf32>
      %37 = arith.subf %33, %34 : vector<8x1xf32>
      %38 = math.exp %37 : vector<8x1xf32>
      %39 = arith.addf %36, %38 : vector<8x1xf32>
      %40 = tpu.reciprocal %39 : vector<8x1xf32> -> vector<8x1xf32>
      %41 = arith.mulf %36, %40 : vector<8x1xf32>
      %42 = arith.mulf %38, %40 : vector<8x1xf32>
      %43 = math.log %39 : vector<8x1xf32>
      %44 = arith.subf %25, %34 : vector<8x1xf32>
      %45 = arith.subf %44, %43 : vector<8x1xf32>
      %46 = arith.subf %33, %34 : vector<8x1xf32>
      %47 = arith.subf %46, %43 : vector<8x1xf32>
      %c0_19 = arith.constant 0 : index
      %c0_20 = arith.constant 0 : index
      %48 = vector.load %arg6[%c0_19, %c0_20] : memref<8x1xi32, #tpu.memory_space<vmem>>, vector<8x1xi32>
      %c0_i32_21 = arith.constant 0 : i32
      %49 = vector.broadcast %c0_i32_21 : i32 to vector<8x1xi32>
      %50 = arith.cmpi eq, %48, %49 : vector<8x1xi32>
      %51 = arith.select %50, %45, %47 : vector<8x1xi1>, vector<8x1xf32>
      %cst_22 = arith.constant 0.000000e+00 : f32
      %52 = vector.broadcast %cst_22 : f32 to vector<8x1xf32>
      %53 = arith.subf %52, %51 : vector<8x1xf32>
      %54 = tpu.iota {dimensions = array<i32: 1>} : vector<8x128xi32>
      %c0_i32_23 = arith.constant 0 : i32
      %55 = vector.broadcast %c0_i32_23 : i32 to vector<8x128xi32>
      %56 = arith.cmpi eq, %54, %55 : vector<8x128xi32>
      %c1_i32 = arith.constant 1 : i32
      %57 = vector.broadcast %c1_i32 : i32 to vector<8x128xi32>
      %58 = arith.cmpi eq, %54, %57 : vector<8x128xi32>
      %c2_i32 = arith.constant 2 : i32
      %59 = vector.broadcast %c2_i32 : i32 to vector<8x128xi32>
      %60 = arith.cmpi eq, %54, %59 : vector<8x128xi32>
      %cst_24 = arith.constant 0.000000e+00 : f32
      %61 = vector.shape_cast %42 : vector<8x1xf32> to vector<8x1xf32>
      %62 = vector.broadcast %61 : vector<8x1xf32> to vector<8x128xf32>
      %63 = vector.broadcast %cst_24 : f32 to vector<8x128xf32>
      %64 = arith.select %60, %62, %63 : vector<8x128xi1>, vector<8x128xf32>
      %65 = vector.shape_cast %41 : vector<8x1xf32> to vector<8x1xf32>
      %66 = vector.broadcast %65 : vector<8x1xf32> to vector<8x128xf32>
      %67 = arith.select %58, %66, %64 : vector<8x128xi1>, vector<8x128xf32>
      %68 = vector.shape_cast %53 : vector<8x1xf32> to vector<8x1xf32>
      %69 = vector.broadcast %68 : vector<8x1xf32> to vector<8x128xf32>
      %70 = arith.select %56, %69, %67 : vector<8x128xi1>, vector<8x128xf32>
      %c0_25 = arith.constant 0 : index
      %c0_26 = arith.constant 0 : index
      %71 = vector.load %arg7[%c0_25, %c0_26] : memref<8x128xf32, #tpu.memory_space<vmem>>, vector<8x128xf32>
      tpu.vector_store %arg7[%c0_25, %c0_26], %70 {strides = array<i32>} : memref<8x128xf32, #tpu.memory_space<vmem>>, vector<8x128xf32>,
    } else {
    }
    return
  }
  func.func @transform_0(%arg0: i32, %arg1: i32) -> (i32, i32, i32) {
    %c0_i32 = arith.constant 0 : i32
    %c0_i32_0 = arith.constant 0 : i32
    return %arg0, %arg1, %c0_i32 : i32, i32, i32
  }
  func.func @transform_1(%arg0: i32, %arg1: i32) -> (i32, i32) {
    %c0_i32 = arith.constant 0 : i32
    return %arg0, %arg1 : i32, i32
  }
  func.func @transform_2(%arg0: i32, %arg1: i32) -> (i32, i32) {
    %c0_i32 = arith.constant 0 : i32
    %c0_i32_0 = arith.constant 0 : i32
    %c0_i32_1 = arith.constant 0 : i32
    return %c0_i32, %c0_i32_0 : i32, i32
  }
  func.func @transform_3(%arg0: i32, %arg1: i32) -> (i32, i32) {
    %c0_i32 = arith.constant 0 : i32
    %c0_i32_0 = arith.constant 0 : i32
    %c0_i32_1 = arith.constant 0 : i32
    return %c0_i32, %c0_i32_0 : i32, i32
  }
  func.func @transform_4(%arg0: i32, %arg1: i32) -> (i32, i32) {
    %c0_i32 = arith.constant 0 : i32
    %c0_i32_0 = arith.constant 0 : i32
    return %arg0, %c0_i32 : i32, i32
  }
  func.func @transform_5(%arg0: i32, %arg1: i32) -> (i32, i32) {
    %c0_i32 = arith.constant 0 : i32
    %c0_i32_0 = arith.constant 0 : i32
    return %arg0, %c0_i32 : i32, i32
  }
}

</mosaic_0001>

<llo_original>
// kernel: svuld_forward.1
$region0: #{svuld_forward.1}
  #allocation0 [shape = 'u32[]', space=smem, size = 0x4, offset = 0x4, fixed_abs, tag = 'smem constant byte address 0x4 - core index']
  #allocation1 [shape = 'u32[144,128]{1,0:T(1,128)}', space=vmem, size = 0x12000, scoped, tag = 'internal scratch']
  #allocation2 [shape = 'f32[8,128]{1,0:T(8,128)}', space=vmem, size = 0x1000, scoped, tag = 'scratch operand']
  %s0 = inlined_call_operand.hbm [shape: bf16[16,256,128], index: 0, kind: input, shape index: {}]
  %s1 = inlined_call_operand.vmem [shape: f32[16,256], index: 1, kind: input, shape index: {}]
  %s2 = inlined_call_operand.vmem [shape: f32[2,128], index: 2, kind: input, shape index: {}]
  %s3 = inlined_call_operand.vmem [shape: f32[1,2], index: 3, kind: input, shape index: {}]
  %s4 = inlined_call_operand.vmem [shape: s32[16,1], index: 4, kind: input, shape index: {}]
  %s5 = inlined_call_operand.vmem [shape: f32[16,128], index: 5, kind: output, shape index: {}]
  %s6 = sld [smem:[#allocation0]]
  $region65: #{svuld_forward.1} parent=0
    _
  %s8 = ssub.s32 1, %s6
  %s9 = scalar_select 0, %s8, %s6
  $region1: #{svuld_forward.1} parent=0
    #allocation3 [shape = 'u8[1048576]{0}', space=vmem, size = 0x100000, scoped, tag = 'input window, operand 0']
    #allocation4 [shape = 's32[2]{0}', space=sflag, size = 0x8, scoped, tag = 'scoped memory for svuld_forward.1']
    %10 = vsyncpa [#allocation4], 0
    %s11 = scalar_lea.sflag [#allocation4], 1
    %12 = vsyncpa %s11, 0
    loop: start=0, step=1, limit=4
    $region2: #{svuld_forward.1} parent=1 // loop_pre_header
      _
    $region3: #{svuld_forward.1} parent=1 // loop_header
      %s14 = sphi 0, %s18
      %p15 = scmp.ge.s32.totalorder %s14, 4
      %s21 = sphi 0, %s33
      %s22 = sphi 0, %s29
      %s23 = sphi 0, %s21
      %s24 = sphi 0, %s22
      %s25 = sphi 0, %s23
      %s26 = sphi 0, %s24
      %s38 = sphi 0, %s40
      %s41 = sphi 0, %s38
      %s42 = sphi 0, %s41
      %s58 = sphi 0, %s42
      %s66 = sphi 0, %s68
      %s69 = sphi 0, %s66
      %s70 = sphi 0, %s69
      %s86 = sphi 0, %s70
      %s90 = sphi 0, %s90
      %s92 = sphi 0, %s90
      %s93 = sphi 0, %s92
      %s107 = sphi 0, %s93
      %s111 = sphi 0, %s111
      %s113 = sphi 0, %s111
      %s114 = sphi 0, %s113
      %s128 = sphi 0, %s114
      %s134 = sphi 0, %s136
      %s137 = sphi 0, %s134
      %s138 = sphi 0, %s137
      %s154 = sphi 0, %s138
      %s160 = sphi 0, %s162
      %s163 = sphi 0, %s160
      %s164 = sphi 0, %s163
      %s180 = sphi 0, %s164
    $region4: #{svuld_forward.1} parent=1 // loop_header_branch
      %17 = sbr.rel (%p15) target = $region8
    $region5: #{svuld_forward.1} parent=1 // loop_body
      %s19 = ssub.s32 %s14, 1
      %s20 = ssub.s32 %s14, 2
      %s27 = sadd.s32 1, %s22
      %p28 = scmp.ge.s32.totalorder %s27, 1
      %s29 = scalar_select %p28, 0, %s27
      %s30 = sadd.s32 1, %s21
      %s31 = scalar_select %p28, %s30, %s21
      %p32 = scmp.ge.s32.totalorder %s31, 2
      %s33 = scalar_select %p32, 0, %s31
      %s34 = ssub.s32 %s21, %s33
      %s35 = ssub.s32 %s22, %s29
      %s36 = sor.u32 %s34, %s35
      %p37 = scmp.eq.s32.totalorder %s36, 0
      %s39 = sadd.s32 %s38, 1
      %s40 = scalar_select %p37, %s38, %s39
      %p43 = pneg %p37
      %p44 = scmp.eq.s32.totalorder %s14, 1
      %p45 = por %p43, %p44
      %p46 = scmp.ne.s32.totalorder %s38, %s41
      %p47 = scmp.eq.s32.totalorder %s14, 0
      %p48 = por %p46, %p47
      %p49 = scmp.ne.s32.totalorder %s38, %s41
      %p50 = scmp.eq.s32.totalorder %s19, 1
      %p51 = por %p49, %p50
      %p52 = scmp.ne.s32.totalorder %s41, %s42
      %p53 = scmp.eq.s32.totalorder %s19, 0
      %p54 = por %p52, %p53
      %p55 = scmp.ne.s32.totalorder %s41, %s42
      %p56 = scmp.eq.s32.totalorder %s20, 1
      %p57 = por %p55, %p56
      %p59 = scmp.ne.s32.totalorder %s42, %s58
      %p60 = scmp.eq.s32.totalorder %s20, 0
      %p61 = por %p59, %p60
      %s62 = ssub.s32 %s21, %s33
      %s63 = ssub.s32 %s22, %s29
      %s64 = sor.u32 %s62, %s63
      %p65 = scmp.eq.s32.totalorder %s64, 0
      %s67 = sadd.s32 %s66, 1
      %s68 = scalar_select %p65, %s66, %s67
      %p71 = pneg %p65
      %p72 = scmp.eq.s32.totalorder %s14, 1
      %p73 = por %p71, %p72
      %p74 = scmp.ne.s32.totalorder %s66, %s69
      %p75 = scmp.eq.s32.totalorder %s14, 0
      %p76 = por %p74, %p75
      %p77 = scmp.ne.s32.totalorder %s66, %s69
      %p78 = scmp.eq.s32.totalorder %s19, 1
      %p79 = por %p77, %p78
      %p80 = scmp.ne.s32.totalorder %s69, %s70
      %p81 = scmp.eq.s32.totalorder %s19, 0
      %p82 = por %p80, %p81
      %p83 = scmp.ne.s32.totalorder %s69, %s70
      %p84 = scmp.eq.s32.totalorder %s20, 1
      %p85 = por %p83, %p84
      %p87 = scmp.ne.s32.totalorder %s70, %s86
      %p88 = scmp.eq.s32.totalorder %s20, 0
      %p89 = por %p87, %p88
      %s91 = sadd.s32 %s90, 1
      %p94 = scmp.eq.s32.totalorder %s14, 1
      %p95 = scmp.ne.s32.totalorder %s90, %s92
      %p96 = scmp.eq.s32.totalorder %s14, 0
      %p97 = por %p95, %p96
      %p98 = scmp.ne.s32.totalorder %s90, %s92
      %p99 = scmp.eq.s32.totalorder %s19, 1
      %p100 = por %p98, %p99
      %p101 = scmp.ne.s32.totalorder %s92, %s93
      %p102 = scmp.eq.s32.totalorder %s19, 0
      %p103 = por %p101, %p102
      %p104 = scmp.ne.s32.totalorder %s92, %s93
      %p105 = scmp.eq.s32.totalorder %s20, 1
      %p106 = por %p104, %p105
      %p108 = scmp.ne.s32.totalorder %s93, %s107
      %p109 = scmp.eq.s32.totalorder %s20, 0
      %p110 = por %p108, %p109
      %s112 = sadd.s32 %s111, 1
      %p115 = scmp.eq.s32.totalorder %s14, 1
      %p116 = scmp.ne.s32.totalorder %s111, %s113
      %p117 = scmp.eq.s32.totalorder %s14, 0
      %p118 = por %p116, %p117
      %p119 = scmp.ne.s32.totalorder %s111, %s113
      %p120 = scmp.eq.s32.totalorder %s19, 1
      %p121 = por %p119, %p120
      %p122 = scmp.ne.s32.totalorder %s113, %s114
      %p123 = scmp.eq.s32.totalorder %s19, 0
      %p124 = por %p122, %p123
      %p125 = scmp.ne.s32.totalorder %s113, %s114
      %p126 = scmp.eq.s32.totalorder %s20, 1
      %p127 = por %p125, %p126
      %p129 = scmp.ne.s32.totalorder %s114, %s128
      %p130 = scmp.eq.s32.totalorder %s20, 0
      %p131 = por %p129, %p130
      %s132 = ssub.s32 %s21, %s33
      %p133 = scmp.eq.s32.totalorder %s132, 0
      %s135 = sadd.s32 %s134, 1
      %s136 = scalar_select %p133, %s134, %s135
      %p139 = pneg %p133
      %p140 = scmp.eq.s32.totalorder %s14, 1
      %p141 = por %p139, %p140
      %p142 = scmp.ne.s32.totalorder %s134, %s137
      %p143 = scmp.eq.s32.totalorder %s14, 0
      %p144 = por %p142, %p143
      %p145 = scmp.ne.s32.totalorder %s134, %s137
      %p146 = scmp.eq.s32.totalorder %s19, 1
      %p147 = por %p145, %p146
      %p148 = scmp.ne.s32.totalorder %s137, %s138
      %p149 = scmp.eq.s32.totalorder %s19, 0
      %p150 = por %p148, %p149
      %p151 = scmp.ne.s32.totalorder %s137, %s138
      %p152 = scmp.eq.s32.totalorder %s20, 1
      %p153 = por %p151, %p152
      %p155 = scmp.ne.s32.totalorder %s138, %s154
      %p156 = scmp.eq.s32.totalorder %s20, 0
      %p157 = por %p155, %p156
      %s158 = ssub.s32 %s21, %s33
      %p159 = scmp.eq.s32.totalorder %s158, 0
      %s161 = sadd.s32 %s160, 1
      %s162 = scalar_select %p159, %s160, %s161
      %p165 = pneg %p159
      %p166 = scmp.eq.s32.totalorder %s14, 1
      %p167 = por %p165, %p166
      %p168 = scmp.ne.s32.totalorder %s160, %s163
      %p169 = scmp.eq.s32.totalorder %s14, 0
      %p170 = por %p168, %p169
      %p171 = scmp.ne.s32.totalorder %s160, %s163
      %p172 = scmp.eq.s32.totalorder %s19, 1
      %p173 = por %p171, %p172
      %p174 = scmp.ne.s32.totalorder %s163, %s164
      %p175 = scmp.eq.s32.totalorder %s19, 0
      %p176 = por %p174, %p175
      %p177 = scmp.ne.s32.totalorder %s163, %s164
      %p178 = scmp.eq.s32.totalorder %s20, 1
      %p179 = por %p177, %p178
      %p181 = scmp.ne.s32.totalorder %s164, %s180
      %p182 = scmp.eq.s32.totalorder %s20, 0
      %p183 = por %p181, %p182
      %p184 = scmp.le.s32.totalorder 1, %s14
      %p185 = scmp.lt.s32.totalorder %s14, 3
      %p186 = pnand %p184, %p185
      %p187 = pneg %p186
      // Predicated region
      $region9: #{svuld_forward.1} parent=5 // pred_check
        _
      $region10: #{svuld_forward.1} parent=5 // pred_check_branch
        %189 = sbr.rel (%p186) target = $region12
      $region11: #{svuld_forward.1} parent=5 // pred_region
        %s190 = ssub.s32 %s14, 1
        // Predicated region
        $region13: #{svuld_forward.1} parent=11 // pred_check
          %p191 = pneg %p103
        $region14: #{svuld_forward.1} parent=11 // pred_check_branch
          %193 = sbr.rel (%p191) target = $region16
        $region15: #{svuld_forward.1} parent=11 // pred_region
          _
        $region16: #{svuld_forward.1} parent=11 // pred_fallthru
          _
        // Predicated region
        $region17: #{svuld_forward.1} parent=11 // pred_check
          %p194 = pneg %p124
        $region18: #{svuld_forward.1} parent=11 // pred_check_branch
          %196 = sbr.rel (%p194) target = $region20
        $region19: #{svuld_forward.1} parent=11 // pred_region
          _
        $region20: #{svuld_forward.1} parent=11 // pred_fallthru
          _
      $region12: #{svuld_forward.1} parent=5 // pred_fallthru
        _
      %p197 = scmp.lt.s32.totalorder %s14, 2
      // Predicated region
      $region21: #{svuld_forward.1} parent=5 // pred_check
        %p198 = pneg %p197
      $region22: #{svuld_forward.1} parent=5 // pred_check_branch
        %200 = sbr.rel (%p198) target = $region24
      $region23: #{svuld_forward.1} parent=5 // pred_region
        // Predicated region
        $region25: #{svuld_forward.1} parent=23 // pred_check
          %p201 = pneg %p48
        $region26: #{svuld_forward.1} parent=23 // pred_check_branch
          %203 = sbr.rel (%p201) target = $region28
        $region27: #{svuld_forward.1} parent=23 // pred_region
          %s204 = sand.u32 %s38, 1
          %s205 = scalar_lea.sflag [#allocation4], %s204
          %s206 = sand.u32 %s38, 1
          %s207 = smul.addr %s206, 1024
          %s208 = scalar_lea.vmem [#allocation3], %s207
          %s209 = smul.u32 8, %s21
          %s210 = smul.u32 32, %s22
          %s212 = ssub.s32 16384, 16384
          %213 = vsyncadd %s205, %s212
          %s214 = smul.addr %s209, 32
          %s215 = sadd.s32 %s210, %s214
          %s216 = smul.addr %s215, 64
          %s217 = scalar_lea.hbm %s0, %s216
          %s218 = sshll.u32 %s208, 4
          %s219 = int_to_ptr.vmem [resolvable:$true] %s218
          %224 = dma.hbm_to_vmem [thread:$0]  %s217, 16384, %s219, %s205, 64, 64, 4
        $region28: #{svuld_forward.1} parent=23 // pred_fallthru
          _
        // Predicated region
        $region29: #{svuld_forward.1} parent=23 // pred_check
          %p225 = pneg %p76
        $region30: #{svuld_forward.1} parent=23 // pred_check_branch
          %227 = sbr.rel (%p225) target = $region32
        $region31: #{svuld_forward.1} parent=23 // pred_region
          %s228 = smul.u32 2, %s22
          %p229 = scmp.lt.s32.totalorder %s21, 1
          %s230 = scalar_select %p229, %s21, 1
          %p231 = scmp.lt.s32.totalorder %s228, 1
          %s232 = scalar_select %p231, %s228, 1
          %s233 = smul.addr %s230, 2
          %s234 = sadd.s32 %s232, %s233
          %s235 = smul.addr %s234, 8
          %s236 = scalar_lea.vmem %s1, %s235
          %s237 = smul.u32 2, %s22
        $region32: #{svuld_forward.1} parent=23 // pred_fallthru
          _
        // Predicated region
        $region33: #{svuld_forward.1} parent=23 // pred_check
          %p238 = pneg %p144
        $region34: #{svuld_forward.1} parent=23 // pred_check_branch
          %240 = sbr.rel (%p238) target = $region36
        $region35: #{svuld_forward.1} parent=23 // pred_region
          %p241 = scmp.lt.s32.totalorder %s21, 1
          %s242 = scalar_select %p241, %s21, 1
          %s243 = smul.addr %s242, 8
          %s244 = scalar_lea.vmem %s4, %s243
        $region36: #{svuld_forward.1} parent=23 // pred_fallthru
          _
      $region24: #{svuld_forward.1} parent=5 // pred_fallthru
        _
      %p245 = scmp.le.s32.totalorder 1, %s14
      %p246 = scmp.lt.s32.totalorder %s14, 3
      %p247 = pnand %p245, %p246
      %p248 = pneg %p247
      // Predicated region
      $region37: #{svuld_forward.1} parent=5 // pred_check
        _
      $region38: #{svuld_forward.1} parent=5 // pred_check_branch
        %250 = sbr.rel (%p247) target = $region40
      $region39: #{svuld_forward.1} parent=5 // pred_region
        %s251 = ssub.s32 %s14, 1
        %s252 = sand.u32 %s41, 1
        %s253 = scalar_lea.sflag [#allocation4], %s252
        %s254 = sand.u32 %s41, 1
        %s255 = smul.addr %s254, 1024
        %s256 = scalar_lea.vmem [#allocation3], %s255
        // Predicated region
        $region41: #{svuld_forward.1} parent=39 // pred_check
          %p257 = pneg %p54
        $region42: #{svuld_forward.1} parent=39 // pred_check_branch
          %259 = sbr.rel (%p257) target = $region44
        $region43: #{svuld_forward.1} parent=39 // pred_region
          %260 = dma.done %s253, 16384
        $region44: #{svuld_forward.1} parent=39 // pred_fallthru
          _
        %s261 = sand.u32 %s41, 1
        %s262 = scalar_lea.sflag [#allocation4], %s261
        %s263 = sand.u32 %s41, 1
        %s264 = smul.addr %s263, 1024
        %s265 = scalar_lea.vmem [#allocation3], %s264
        %p266 = pneg %p54
        %p267 = pneg %p51
        %s268 = smul.u32 2, %s24
        %p269 = scmp.lt.s32.totalorder %s23, 1
        %s270 = scalar_select %p269, %s23, 1
        %p271 = scmp.lt.s32.totalorder %s268, 1
        %s272 = scalar_select %p271, %s268, 1
        %s273 = smul.addr %s270, 2
        %s274 = sadd.s32 %s272, %s273
        %s275 = smul.addr %s274, 8
        %s276 = scalar_lea.vmem %s1, %s275
        %p277 = pneg %p82
        %p278 = pneg %p79
        %p279 = pneg %p103
        %p280 = pneg %p100
        %p281 = pneg %p124
        %p282 = pneg %p121
        %p283 = scmp.lt.s32.totalorder %s23, 1
        %s284 = scalar_select %p283, %s23, 1
        %s285 = smul.addr %s284, 8
        %s286 = scalar_lea.vmem %s4, %s285
        %p287 = pneg %p150
        %p288 = pneg %p147
        %p289 = pneg %p176
        %p290 = pneg %p173
        %p291 = scmp.lt.s32.totalorder %s23, 1
        %s292 = scalar_select %p291, %s23, 1
        %s293 = smul.addr %s292, 8
        %s294 = scalar_lea.vmem %s5, %s293
        %s295 = smul.u32 8, %s23
        %s296 = smul.u32 32, %s24
        %s297 = smul.u32 2, %s24
        %p298 = scmp.lt.s32.totalorder %s23, 1
        %s299 = scalar_select %p298, %s23, 1
        %p300 = scmp.lt.s32.totalorder %s297, 1
        %s301 = scalar_select %p300, %s297, 1
        %s302 = smul.addr %s299, 2
        %s303 = sadd.s32 %s301, %s302
        %s304 = smul.addr %s303, 8
        %s305 = scalar_lea.vmem %s1, %s304
        %s306 = smul.u32 2, %s24
        %p307 = scmp.lt.s32.totalorder %s23, 1
        %s308 = scalar_select %p307, %s23, 1
        %s309 = smul.addr %s308, 8
        %s310 = scalar_lea.vmem %s4, %s309
        %p311 = scmp.lt.s32.totalorder %s23, 1
        %s312 = scalar_select %p311, %s23, 1
        %s313 = smul.addr %s312, 8
        %s314 = scalar_lea.vmem %s5, %s313
        %p315 = scmp.eq.s32.totalorder %s24, 0
        // Predicated region
        $region45: #{svuld_forward.1} parent=39 // pred_check
          %p316 = pneg %p315
        $region46: #{svuld_forward.1} parent=39 // pred_check_branch
          %318 = sbr.rel (%p316) target = $region48
        $region47: #{svuld_forward.1} parent=39 // pred_region
          %319 = vst [vmem:[#allocation2] sm:$0xff] 0.0
        $region48: #{svuld_forward.1} parent=39 // pred_fallthru
          _
        %v320 = vld [vmem:[%s305] sm:$0xff]
        %v321 = vld [vmem:[%s305 + $0x8] sm:$0xff]
        %v324 = vcombine.low %v320, %v321
        %v325 = vcombine.high %v320, %v321
        %v327 = vunpack.c.l.s4 1966171168
        %v328 = vunpack.c.0.s8 %v327
        %v329 = vlaneseq
        %v330 = vshrl.u32 %v329, 7
        %v331 = vsub.s32 %v328, %v330
        %v332 = vrot.slane %v324, %v331
        %v334 = vunpack.c.l.s4 1966171168
        %v335 = vunpack.c.0.s8 %v334
        %v336 = vlaneseq
        %v337 = vshrl.u32 %v336, 7
        %v338 = vsub.s32 %v335, %v337
        %v339 = vrot.slane %v325, %v338
        %v340 = vcombine.high %v332, %v332
        %v341 = vcombine.high %v339, %v339
        %v343 = vunpack.c.l.s4 1966171168
        %v344 = vunpack.c.0.s8 %v343
        %v345 = vlaneseq
        %v346 = vshrl.u32 %v345, 7
        %v347 = vsub.s32 %v344, %v346
        %v348 = vrot.slane %v332, %v347
        %v350 = vunpack.c.l.s4 1966171168
        %v351 = vunpack.c.0.s8 %v350
        %v352 = vlaneseq
        %v353 = vshrl.u32 %v352, 7
        %v354 = vsub.s32 %v351, %v353
        %v355 = vrot.slane %v339, %v354
        %v357 = vunpack.c.l.s4 1966171168
        %v358 = vunpack.c.0.s8 %v357
        %v359 = vlaneseq
        %v360 = vshrl.u32 %v359, 7
        %v361 = vsub.s32 %v358, %v360
        %v362 = vrot.slane %v340, %v361
        %v364 = vunpack.c.l.s4 1966171168
        %v365 = vunpack.c.0.s8 %v364
        %v366 = vlaneseq
        %v367 = vshrl.u32 %v366, 7
        %v368 = vsub.s32 %v365, %v367
        %v369 = vrot.slane %v341, %v368
        %v370 = vcombine.high %v348, %v348
        %v371 = vcombine.high %v355, %v355
        %v372 = vcombine.high %v362, %v362
        %v373 = vcombine.high %v369, %v369
        %v374 = vld [vmem:[%s256] sm:$0xf]
        %v375 = vld [vmem:[%s256 + $0x4] sm:$0xf]
        %v376 = vld [vmem:[%s256 + $0x8] sm:$0xf]
        %v377 = vld [vmem:[%s256 + $0xc] sm:$0xf]
        %v378 = vld [vmem:[%s256 + $0x10] sm:$0xf]
        %v379 = vld [vmem:[%s256 + $0x14] sm:$0xf]
        %v380 = vld [vmem:[%s256 + $0x18] sm:$0xf]
        %v381 = vld [vmem:[%s256 + $0x1c] sm:$0xf]
        %v382 = vld [vmem:[%s256 + $0x20] sm:$0xf]
        %v383 = vld [vmem:[%s256 + $0x24] sm:$0xf]
        %v384 = vld [vmem:[%s256 + $0x28] sm:$0xf]
        %v385 = vld [vmem:[%s256 + $0x2c] sm:$0xf]
        %v386 = vld [vmem:[%s256 + $0x30] sm:$0xf]
        %v387 = vld [vmem:[%s256 + $0x34] sm:$0xf]
        %v388 = vld [vmem:[%s256 + $0x38] sm:$0xf]
        %v389 = vld [vmem:[%s256 + $0x3c] sm:$0xf]
        %v390 = vld [vmem:[%s256 + $0x40] sm:$0xf]
        %v391 = vld [vmem:[%s256 + $0x44] sm:$0xf]
        %v392 = vld [vmem:[%s256 + $0x48] sm:$0xf]
        %v393 = vld [vmem:[%s256 + $0x4c] sm:$0xf]
        %v394 = vld [vmem:[%s256 + $0x50] sm:$0xf]
        %v395 = vld [vmem:[%s256 + $0x54] sm:$0xf]
        %v396 = vld [vmem:[%s256 + $0x58] sm:$0xf]
        %v397 = vld [vmem:[%s256 + $0x5c] sm:$0xf]
        %v398 = vld [vmem:[%s256 + $0x60] sm:$0xf]
        %v399 = vld [vmem:[%s256 + $0x64] sm:$0xf]
        %v400 = vld [vmem:[%s256 + $0x68] sm:$0xf]
        %v401 = vld [vmem:[%s256 + $0x6c] sm:$0xf]
        %v402 = vld [vmem:[%s256 + $0x70] sm:$0xf]
        %v403 = vld [vmem:[%s256 + $0x74] sm:$0xf]
        %v404 = vld [vmem:[%s256 + $0x78] sm:$0xf]
        %v405 = vld [vmem:[%s256 + $0x7c] sm:$0xf]
        %v406 = vld [vmem:[%s256 + $0x80] sm:$0xf]
        %v407 = vld [vmem:[%s256 + $0x84] sm:$0xf]
        %v408 = vld [vmem:[%s256 + $0x88] sm:$0xf]
        %v409 = vld [vmem:[%s256 + $0x8c] sm:$0xf]
        %v410 = vld [vmem:[%s256 + $0x90] sm:$0xf]
        %v411 = vld [vmem:[%s256 + $0x94] sm:$0xf]
        %v412 = vld [vmem:[%s256 + $0x98] sm:$0xf]
        %v413 = vld [vmem:[%s256 + $0x9c] sm:$0xf]
        %v414 = vld [vmem:[%s256 + $0xa0] sm:$0xf]
        %v415 = vld [vmem:[%s256 + $0xa4] sm:$0xf]
        %v416 = vld [vmem:[%s256 + $0xa8] sm:$0xf]
        %v417 = vld [vmem:[%s256 + $0xac] sm:$0xf]
        %v418 = vld [vmem:[%s256 + $0xb0] sm:$0xf]
        %v419 = vld [vmem:[%s256 + $0xb4] sm:$0xf]
        %v420 = vld [vmem:[%s256 + $0xb8] sm:$0xf]
        %v421 = vld [vmem:[%s256 + $0xbc] sm:$0xf]
        %v422 = vld [vmem:[%s256 + $0xc0] sm:$0xf]
        %v423 = vld [vmem:[%s256 + $0xc4] sm:$0xf]
        %v424 = vld [vmem:[%s256 + $0xc8] sm:$0xf]
        %v425 = vld [vmem:[%s256 + $0xcc] sm:$0xf]
        %v426 = vld [vmem:[%s256 + $0xd0] sm:$0xf]
        %v427 = vld [vmem:[%s256 + $0xd4] sm:$0xf]
        %v428 = vld [vmem:[%s256 + $0xd8] sm:$0xf]
        %v429 = vld [vmem:[%s256 + $0xdc] sm:$0xf]
        %v430 = vld [vmem:[%s256 + $0xe0] sm:$0xf]
        %v431 = vld [vmem:[%s256 + $0xe4] sm:$0xf]
        %v432 = vld [vmem:[%s256 + $0xe8] sm:$0xf]
        %v433 = vld [vmem:[%s256 + $0xec] sm:$0xf]
        %v434 = vld [vmem:[%s256 + $0xf0] sm:$0xf]
        %v435 = vld [vmem:[%s256 + $0xf4] sm:$0xf]
        %v436 = vld [vmem:[%s256 + $0xf8] sm:$0xf]
        %v437 = vld [vmem:[%s256 + $0xfc] sm:$0xf]
        %v438 = vld [vmem:[%s256 + $0x100] sm:$0xf]
        %v439 = vld [vmem:[%s256 + $0x104] sm:$0xf]
        %v440 = vld [vmem:[%s256 + $0x108] sm:$0xf]
        %v441 = vld [vmem:[%s256 + $0x10c] sm:$0xf]
        %v442 = vld [vmem:[%s256 + $0x110] sm:$0xf]
        %v443 = vld [vmem:[%s256 + $0x114] sm:$0xf]
        %v444 = vld [vmem:[%s256 + $0x118] sm:$0xf]
        %v445 = vld [vmem:[%s256 + $0x11c] sm:$0xf]
        %v446 = vld [vmem:[%s256 + $0x120] sm:$0xf]
        %v447 = vld [vmem:[%s256 + $0x124] sm:$0xf]
        %v448 = vld [vmem:[%s256 + $0x128] sm:$0xf]
        %v449 = vld [vmem:[%s256 + $0x12c] sm:$0xf]
        %v450 = vld [vmem:[%s256 + $0x130] sm:$0xf]
        %v451 = vld [vmem:[%s256 + $0x134] sm:$0xf]
        %v452 = vld [vmem:[%s256 + $0x138] sm:$0xf]
        %v453 = vld [vmem:[%s256 + $0x13c] sm:$0xf]
        %v454 = vld [vmem:[%s256 + $0x140] sm:$0xf]
        %v455 = vld [vmem:[%s256 + $0x144] sm:$0xf]
        %v456 = vld [vmem:[%s256 + $0x148] sm:$0xf]
        %v457 = vld [vmem:[%s256 + $0x14c] sm:$0xf]
        %v458 = vld [vmem:[%s256 + $0x150] sm:$0xf]
        %v459 = vld [vmem:[%s256 + $0x154] sm:$0xf]
        %v460 = vld [vmem:[%s256 + $0x158] sm:$0xf]
        %v461 = vld [vmem:[%s256 + $0x15c] sm:$0xf]
        %v462 = vld [vmem:[%s256 + $0x160] sm:$0xf]
        %v463 = vld [vmem:[%s256 + $0x164] sm:$0xf]
        %v464 = vld [vmem:[%s256 + $0x168] sm:$0xf]
        %v465 = vld [vmem:[%s256 + $0x16c] sm:$0xf]
        %v466 = vld [vmem:[%s256 + $0x170] sm:$0xf]
        %v467 = vld [vmem:[%s256 + $0x174] sm:$0xf]
        %v468 = vld [vmem:[%s256 + $0x178] sm:$0xf]
        %v469 = vld [vmem:[%s256 + $0x17c] sm:$0xf]
        %v470 = vld [vmem:[%s256 + $0x180] sm:$0xf]
        %v471 = vld [vmem:[%s256 + $0x184] sm:$0xf]
        %v472 = vld [vmem:[%s256 + $0x188] sm:$0xf]
        %v473 = vld [vmem:[%s256 + $0x18c] sm:$0xf]
        %v474 = vld [vmem:[%s256 + $0x190] sm:$0xf]
        %v475 = vld [vmem:[%s256 + $0x194] sm:$0xf]
        %v476 = vld [vmem:[%s256 + $0x198] sm:$0xf]
        %v477 = vld [vmem:[%s256 + $0x19c] sm:$0xf]
        %v478 = vld [vmem:[%s256 + $0x1a0] sm:$0xf]
        %v479 = vld [vmem:[%s256 + $0x1a4] sm:$0xf]
        %v480 = vld [vmem:[%s256 + $0x1a8] sm:$0xf]
        %v481 = vld [vmem:[%s256 + $0x1ac] sm:$0xf]
        %v482 = vld [vmem:[%s256 + $0x1b0] sm:$0xf]
        %v483 = vld [vmem:[%s256 + $0x1b4] sm:$0xf]
        %v484 = vld [vmem:[%s256 + $0x1b8] sm:$0xf]
        %v485 = vld [vmem:[%s256 + $0x1bc] sm:$0xf]
        %v486 = vld [vmem:[%s256 + $0x1c0] sm:$0xf]
        %v487 = vld [vmem:[%s256 + $0x1c4] sm:$0xf]
        %v488 = vld [vmem:[%s256 + $0x1c8] sm:$0xf]
        %v489 = vld [vmem:[%s256 + $0x1cc] sm:$0xf]
        %v490 = vld [vmem:[%s256 + $0x1d0] sm:$0xf]
        %v491 = vld [vmem:[%s256 + $0x1d4] sm:$0xf]
        %v492 = vld [vmem:[%s256 + $0x1d8] sm:$0xf]
        %v493 = vld [vmem:[%s256 + $0x1dc] sm:$0xf]
        %v494 = vld [vmem:[%s256 + $0x1e0] sm:$0xf]
        %v495 = vld [vmem:[%s256 + $0x1e4] sm:$0xf]
        %v496 = vld [vmem:[%s256 + $0x1e8] sm:$0xf]
        %v497 = vld [vmem:[%s256 + $0x1ec] sm:$0xf]
        %v498 = vld [vmem:[%s256 + $0x1f0] sm:$0xf]
        %v499 = vld [vmem:[%s256 + $0x1f4] sm:$0xf]
        %v500 = vld [vmem:[%s256 + $0x1f8] sm:$0xf]
        %v501 = vld [vmem:[%s256 + $0x1fc] sm:$0xf]
        %v502 = vld [vmem:[%s256 + $0x200] sm:$0xf]
        %v503 = vld [vmem:[%s256 + $0x204] sm:$0xf]
        %v504 = vld [vmem:[%s256 + $0x208] sm:$0xf]
        %v505 = vld [vmem:[%s256 + $0x20c] sm:$0xf]
        %v506 = vld [vmem:[%s256 + $0x210] sm:$0xf]
        %v507 = vld [vmem:[%s256 + $0x214] sm:$0xf]
        %v508 = vld [vmem:[%s256 + $0x218] sm:$0xf]
        %v509 = vld [vmem:[%s256 + $0x21c] sm:$0xf]
        %v510 = vld [vmem:[%s256 + $0x220] sm:$0xf]
        %v511 = vld [vmem:[%s256 + $0x224] sm:$0xf]
        %v512 = vld [vmem:[%s256 + $0x228] sm:$0xf]
        %v513 = vld [vmem:[%s256 + $0x22c] sm:$0xf]
        %v514 = vld [vmem:[%s256 + $0x230] sm:$0xf]
        %v515 = vld [vmem:[%s256 + $0x234] sm:$0xf]
        %v516 = vld [vmem:[%s256 + $0x238] sm:$0xf]
        %v517 = vld [vmem:[%s256 + $0x23c] sm:$0xf]
        %v518 = vld [vmem:[%s256 + $0x240] sm:$0xf]
        %v519 = vld [vmem:[%s256 + $0x244] sm:$0xf]
        %v520 = vld [vmem:[%s256 + $0x248] sm:$0xf]
        %v521 = vld [vmem:[%s256 + $0x24c] sm:$0xf]
        %v522 = vld [vmem:[%s256 + $0x250] sm:$0xf]
        %v523 = vld [vmem:[%s256 + $0x254] sm:$0xf]
        %v524 = vld [vmem:[%s256 + $0x258] sm:$0xf]
        %v525 = vld [vmem:[%s256 + $0x25c] sm:$0xf]
        %v526 = vld [vmem:[%s256 + $0x260] sm:$0xf]
        %v527 = vld [vmem:[%s256 + $0x264] sm:$0xf]
        %v528 = vld [vmem:[%s256 + $0x268] sm:$0xf]
        %v529 = vld [vmem:[%s256 + $0x26c] sm:$0xf]
        %v530 = vld [vmem:[%s256 + $0x270] sm:$0xf]
        %v531 = vld [vmem:[%s256 + $0x274] sm:$0xf]
        %v532 = vld [vmem:[%s256 + $0x278] sm:$0xf]
        %v533 = vld [vmem:[%s256 + $0x27c] sm:$0xf]
        %v534 = vld [vmem:[%s256 + $0x280] sm:$0xf]
        %v535 = vld [vmem:[%s256 + $0x284] sm:$0xf]
        %v536 = vld [vmem:[%s256 + $0x288] sm:$0xf]
        %v537 = vld [vmem:[%s256 + $0x28c] sm:$0xf]
        %v538 = vld [vmem:[%s256 + $0x290] sm:$0xf]
        %v539 = vld [vmem:[%s256 + $0x294] sm:$0xf]
        %v540 = vld [vmem:[%s256 + $0x298] sm:$0xf]
        %v541 = vld [vmem:[%s256 + $0x29c] sm:$0xf]
        %v542 = vld [vmem:[%s256 + $0x2a0] sm:$0xf]
        %v543 = vld [vmem:[%s256 + $0x2a4] sm:$0xf]
        %v544 = vld [vmem:[%s256 + $0x2a8] sm:$0xf]
        %v545 = vld [vmem:[%s256 + $0x2ac] sm:$0xf]
        %v546 = vld [vmem:[%s256 + $0x2b0] sm:$0xf]
        %v547 = vld [vmem:[%s256 + $0x2b4] sm:$0xf]
        %v548 = vld [vmem:[%s256 + $0x2b8] sm:$0xf]
        %v549 = vld [vmem:[%s256 + $0x2bc] sm:$0xf]
        %v550 = vld [vmem:[%s256 + $0x2c0] sm:$0xf]
        %v551 = vld [vmem:[%s256 + $0x2c4] sm:$0xf]
        %v552 = vld [vmem:[%s256 + $0x2c8] sm:$0xf]
        %v553 = vld [vmem:[%s256 + $0x2cc] sm:$0xf]
        %v554 = vld [vmem:[%s256 + $0x2d0] sm:$0xf]
        %v555 = vld [vmem:[%s256 + $0x2d4] sm:$0xf]
        %v556 = vld [vmem:[%s256 + $0x2d8] sm:$0xf]
        %v557 = vld [vmem:[%s256 + $0x2dc] sm:$0xf]
        %v558 = vld [vmem:[%s256 + $0x2e0] sm:$0xf]
        %v559 = vld [vmem:[%s256 + $0x2e4] sm:$0xf]
        %v560 = vld [vmem:[%s256 + $0x2e8] sm:$0xf]
        %v561 = vld [vmem:[%s256 + $0x2ec] sm:$0xf]
        %v562 = vld [vmem:[%s256 + $0x2f0] sm:$0xf]
        %v563 = vld [vmem:[%s256 + $0x2f4] sm:$0xf]
        %v564 = vld [vmem:[%s256 + $0x2f8] sm:$0xf]
        %v565 = vld [vmem:[%s256 + $0x2fc] sm:$0xf]
        %v566 = vld [vmem:[%s256 + $0x300] sm:$0xf]
        %v567 = vld [vmem:[%s256 + $0x304] sm:$0xf]
        %v568 = vld [vmem:[%s256 + $0x308] sm:$0xf]
        %v569 = vld [vmem:[%s256 + $0x30c] sm:$0xf]
        %v570 = vld [vmem:[%s256 + $0x310] sm:$0xf]
        %v571 = vld [vmem:[%s256 + $0x314] sm:$0xf]
        %v572 = vld [vmem:[%s256 + $0x318] sm:$0xf]
        %v573 = vld [vmem:[%s256 + $0x31c] sm:$0xf]
        %v574 = vld [vmem:[%s256 + $0x320] sm:$0xf]
        %v575 = vld [vmem:[%s256 + $0x324] sm:$0xf]
        %v576 = vld [vmem:[%s256 + $0x328] sm:$0xf]
        %v577 = vld [vmem:[%s256 + $0x32c] sm:$0xf]
        %v578 = vld [vmem:[%s256 + $0x330] sm:$0xf]
        %v579 = vld [vmem:[%s256 + $0x334] sm:$0xf]
        %v580 = vld [vmem:[%s256 + $0x338] sm:$0xf]
        %v581 = vld [vmem:[%s256 + $0x33c] sm:$0xf]
        %v582 = vld [vmem:[%s256 + $0x340] sm:$0xf]
        %v583 = vld [vmem:[%s256 + $0x344] sm:$0xf]
        %v584 = vld [vmem:[%s256 + $0x348] sm:$0xf]
        %v585 = vld [vmem:[%s256 + $0x34c] sm:$0xf]
        %v586 = vld [vmem:[%s256 + $0x350] sm:$0xf]
        %v587 = vld [vmem:[%s256 + $0x354] sm:$0xf]
        %v588 = vld [vmem:[%s256 + $0x358] sm:$0xf]
        %v589 = vld [vmem:[%s256 + $0x35c] sm:$0xf]
        %v590 = vld [vmem:[%s256 + $0x360] sm:$0xf]
        %v591 = vld [vmem:[%s256 + $0x364] sm:$0xf]
        %v592 = vld [vmem:[%s256 + $0x368] sm:$0xf]
        %v593 = vld [vmem:[%s256 + $0x36c] sm:$0xf]
        %v594 = vld [vmem:[%s256 + $0x370] sm:$0xf]
        %v595 = vld [vmem:[%s256 + $0x374] sm:$0xf]
        %v596 = vld [vmem:[%s256 + $0x378] sm:$0xf]
        %v597 = vld [vmem:[%s256 + $0x37c] sm:$0xf]
        %v598 = vld [vmem:[%s256 + $0x380] sm:$0xf]
        %v599 = vld [vmem:[%s256 + $0x384] sm:$0xf]
        %v600 = vld [vmem:[%s256 + $0x388] sm:$0xf]
        %v601 = vld [vmem:[%s256 + $0x38c] sm:$0xf]
        %v602 = vld [vmem:[%s256 + $0x390] sm:$0xf]
        %v603 = vld [vmem:[%s256 + $0x394] sm:$0xf]
        %v604 = vld [vmem:[%s256 + $0x398] sm:$0xf]
        %v605 = vld [vmem:[%s256 + $0x39c] sm:$0xf]
        %v606 = vld [vmem:[%s256 + $0x3a0] sm:$0xf]
        %v607 = vld [vmem:[%s256 + $0x3a4] sm:$0xf]
        %v608 = vld [vmem:[%s256 + $0x3a8] sm:$0xf]
        %v609 = vld [vmem:[%s256 + $0x3ac] sm:$0xf]
        %v610 = vld [vmem:[%s256 + $0x3b0] sm:$0xf]
        %v611 = vld [vmem:[%s256 + $0x3b4] sm:$0xf]
        %v612 = vld [vmem:[%s256 + $0x3b8] sm:$0xf]
        %v613 = vld [vmem:[%s256 + $0x3bc] sm:$0xf]
        %v614 = vld [vmem:[%s256 + $0x3c0] sm:$0xf]
        %v615 = vld [vmem:[%s256 + $0x3c4] sm:$0xf]
        %v616 = vld [vmem:[%s256 + $0x3c8] sm:$0xf]
        %v617 = vld [vmem:[%s256 + $0x3cc] sm:$0xf]
        %v618 = vld [vmem:[%s256 + $0x3d0] sm:$0xf]
        %v619 = vld [vmem:[%s256 + $0x3d4] sm:$0xf]
        %v620 = vld [vmem:[%s256 + $0x3d8] sm:$0xf]
        %v621 = vld [vmem:[%s256 + $0x3dc] sm:$0xf]
        %v622 = vld [vmem:[%s256 + $0x3e0] sm:$0xf]
        %v623 = vld [vmem:[%s256 + $0x3e4] sm:$0xf]
        %v624 = vld [vmem:[%s256 + $0x3e8] sm:$0xf]
        %v625 = vld [vmem:[%s256 + $0x3ec] sm:$0xf]
        %v626 = vld [vmem:[%s256 + $0x3f0] sm:$0xf]
        %v627 = vld [vmem:[%s256 + $0x3f4] sm:$0xf]
        %v628 = vld [vmem:[%s256 + $0x3f8] sm:$0xf]
        %v629 = vld [vmem:[%s256 + $0x3fc] sm:$0xf]
        %v630 = vunpack.c.l.bf16 %v374
        %v631 = vunpack.c.l.bf16 %v375
        %v632 = vunpack.c.l.bf16 %v376
        %v633 = vunpack.c.l.bf16 %v377
        %v634 = vunpack.c.l.bf16 %v378
        %v635 = vunpack.c.l.bf16 %v379
        %v636 = vunpack.c.l.bf16 %v380
        %v637 = vunpack.c.l.bf16 %v381
        %v638 = vunpack.c.l.bf16 %v382
        %v639 = vunpack.c.l.bf16 %v383
        %v640 = vunpack.c.l.bf16 %v384
        %v641 = vunpack.c.l.bf16 %v385
        %v642 = vunpack.c.l.bf16 %v386
        %v643 = vunpack.c.l.bf16 %v387
        %v644 = vunpack.c.l.bf16 %v388
        %v645 = vunpack.c.l.bf16 %v389
        %v646 = vunpack.c.l.bf16 %v390
        %v647 = vunpack.c.l.bf16 %v391
        %v648 = vunpack.c.l.bf16 %v392
        %v649 = vunpack.c.l.bf16 %v393
        %v650 = vunpack.c.l.bf16 %v394
        %v651 = vunpack.c.l.bf16 %v395
        %v652 = vunpack.c.l.bf16 %v396
        %v653 = vunpack.c.l.bf16 %v397
        %v654 = vunpack.c.l.bf16 %v398
        %v655 = vunpack.c.l.bf16 %v399
        %v656 = vunpack.c.l.bf16 %v400
        %v657 = vunpack.c.l.bf16 %v401
        %v658 = vunpack.c.l.bf16 %v402
        %v659 = vunpack.c.l.bf16 %v403
        %v660 = vunpack.c.l.bf16 %v404
        %v661 = vunpack.c.l.bf16 %v405
        %v662 = vunpack.c.l.bf16 %v406
        %v663 = vunpack.c.l.bf16 %v407
        %v664 = vunpack.c.l.bf16 %v408
        %v665 = vunpack.c.l.bf16 %v409
        %v666 = vunpack.c.l.bf16 %v410
        %v667 = vunpack.c.l.bf16 %v411
        %v668 = vunpack.c.l.bf16 %v412
        %v669 = vunpack.c.l.bf16 %v413
        %v670 = vunpack.c.l.bf16 %v414
        %v671 = vunpack.c.l.bf16 %v415
        %v672 = vunpack.c.l.bf16 %v416
        %v673 = vunpack.c.l.bf16 %v417
        %v674 = vunpack.c.l.bf16 %v418
        %v675 = vunpack.c.l.bf16 %v419
        %v676 = vunpack.c.l.bf16 %v420
        %v677 = vunpack.c.l.bf16 %v421
        %v678 = vunpack.c.l.bf16 %v422
        %v679 = vunpack.c.l.bf16 %v423
        %v680 = vunpack.c.l.bf16 %v424
        %v681 = vunpack.c.l.bf16 %v425
        %v682 = vunpack.c.l.bf16 %v426
        %v683 = vunpack.c.l.bf16 %v427
        %v684 = vunpack.c.l.bf16 %v428
        %v685 = vunpack.c.l.bf16 %v429
        %v686 = vunpack.c.l.bf16 %v430
        %v687 = vunpack.c.l.bf16 %v431
        %v688 = vunpack.c.l.bf16 %v432
        %v689 = vunpack.c.l.bf16 %v433
        %v690 = vunpack.c.l.bf16 %v434
        %v691 = vunpack.c.l.bf16 %v435
        %v692 = vunpack.c.l.bf16 %v436
        %v693 = vunpack.c.l.bf16 %v437
        %v694 = vunpack.c.l.bf16 %v438
        %v695 = vunpack.c.l.bf16 %v439
        %v696 = vunpack.c.l.bf16 %v440
        %v697 = vunpack.c.l.bf16 %v441
        %v698 = vunpack.c.l.bf16 %v442
        %v699 = vunpack.c.l.bf16 %v443
        %v700 = vunpack.c.l.bf16 %v444
        %v701 = vunpack.c.l.bf16 %v445
        %v702 = vunpack.c.l.bf16 %v446
        %v703 = vunpack.c.l.bf16 %v447
        %v704 = vunpack.c.l.bf16 %v448
        %v705 = vunpack.c.l.bf16 %v449
        %v706 = vunpack.c.l.bf16 %v450
        %v707 = vunpack.c.l.bf16 %v451
        %v708 = vunpack.c.l.bf16 %v452
        %v709 = vunpack.c.l.bf16 %v453
        %v710 = vunpack.c.l.bf16 %v454
        %v711 = vunpack.c.l.bf16 %v455
        %v712 = vunpack.c.l.bf16 %v456
        %v713 = vunpack.c.l.bf16 %v457
        %v714 = vunpack.c.l.bf16 %v458
        %v715 = vunpack.c.l.bf16 %v459
        %v716 = vunpack.c.l.bf16 %v460
        %v717 = vunpack.c.l.bf16 %v461
        %v718 = vunpack.c.l.bf16 %v462
        %v719 = vunpack.c.l.bf16 %v463
        %v720 = vunpack.c.l.bf16 %v464
        %v721 = vunpack.c.l.bf16 %v465
        %v722 = vunpack.c.l.bf16 %v466
        %v723 = vunpack.c.l.bf16 %v467
        %v724 = vunpack.c.l.bf16 %v468
        %v725 = vunpack.c.l.bf16 %v469
        %v726 = vunpack.c.l.bf16 %v470
        %v727 = vunpack.c.l.bf16 %v471
        %v728 = vunpack.c.l.bf16 %v472
        %v729 = vunpack.c.l.bf16 %v473
        %v730 = vunpack.c.l.bf16 %v474
        %v731 = vunpack.c.l.bf16 %v475
        %v732 = vunpack.c.l.bf16 %v476
        %v733 = vunpack.c.l.bf16 %v477
        %v734 = vunpack.c.l.bf16 %v478
        %v735 = vunpack.c.l.bf16 %v479
        %v736 = vunpack.c.l.bf16 %v480
        %v737 = vunpack.c.l.bf16 %v481
        %v738 = vunpack.c.l.bf16 %v482
        %v739 = vunpack.c.l.bf16 %v483
        %v740 = vunpack.c.l.bf16 %v484
        %v741 = vunpack.c.l.bf16 %v485
        %v742 = vunpack.c.l.bf16 %v486
        %v743 = vunpack.c.l.bf16 %v487
        %v744 = vunpack.c.l.bf16 %v488
        %v745 = vunpack.c.l.bf16 %v489
        %v746 = vunpack.c.l.bf16 %v490
        %v747 = vunpack.c.l.bf16 %v491
        %v748 = vunpack.c.l.bf16 %v492
        %v749 = vunpack.c.l.bf16 %v493
        %v750 = vunpack.c.l.bf16 %v494
        %v751 = vunpack.c.l.bf16 %v495
        %v752 = vunpack.c.l.bf16 %v496
        %v753 = vunpack.c.l.bf16 %v497
        %v754 = vunpack.c.l.bf16 %v498
        %v755 = vunpack.c.l.bf16 %v499
        %v756 = vunpack.c.l.bf16 %v500
        %v757 = vunpack.c.l.bf16 %v501
        %v758 = vunpack.c.l.bf16 %v502
        %v759 = vunpack.c.l.bf16 %v503
        %v760 = vunpack.c.l.bf16 %v504
        %v761 = vunpack.c.l.bf16 %v505
        %v762 = vunpack.c.l.bf16 %v506
        %v763 = vunpack.c.l.bf16 %v507
        %v764 = vunpack.c.l.bf16 %v508
        %v765 = vunpack.c.l.bf16 %v509
        %v766 = vunpack.c.l.bf16 %v510
        %v767 = vunpack.c.l.bf16 %v511
        %v768 = vunpack.c.l.bf16 %v512
        %v769 = vunpack.c.l.bf16 %v513
        %v770 = vunpack.c.l.bf16 %v514
        %v771 = vunpack.c.l.bf16 %v515
        %v772 = vunpack.c.l.bf16 %v516
        %v773 = vunpack.c.l.bf16 %v517
        %v774 = vunpack.c.l.bf16 %v518
        %v775 = vunpack.c.l.bf16 %v519
        %v776 = vunpack.c.l.bf16 %v520
        %v777 = vunpack.c.l.bf16 %v521
        %v778 = vunpack.c.l.bf16 %v522
        %v779 = vunpack.c.l.bf16 %v523
        %v780 = vunpack.c.l.bf16 %v524
        %v781 = vunpack.c.l.bf16 %v525
        %v782 = vunpack.c.l.bf16 %v526
        %v783 = vunpack.c.l.bf16 %v527
        %v784 = vunpack.c.l.bf16 %v528
        %v785 = vunpack.c.l.bf16 %v529
        %v786 = vunpack.c.l.bf16 %v530
        %v787 = vunpack.c.l.bf16 %v531
        %v788 = vunpack.c.l.bf16 %v532
        %v789 = vunpack.c.l.bf16 %v533
        %v790 = vunpack.c.l.bf16 %v534
        %v791 = vunpack.c.l.bf16 %v535
        %v792 = vunpack.c.l.bf16 %v536
        %v793 = vunpack.c.l.bf16 %v537
        %v794 = vunpack.c.l.bf16 %v538
        %v795 = vunpack.c.l.bf16 %v539
        %v796 = vunpack.c.l.bf16 %v540
        %v797 = vunpack.c.l.bf16 %v541
        %v798 = vunpack.c.l.bf16 %v542
        %v799 = vunpack.c.l.bf16 %v543
        %v800 = vunpack.c.l.bf16 %v544
        %v801 = vunpack.c.l.bf16 %v545
        %v802 = vunpack.c.l.bf16 %v546
        %v803 = vunpack.c.l.bf16 %v547
        %v804 = vunpack.c.l.bf16 %v548
        %v805 = vunpack.c.l.bf16 %v549
        %v806 = vunpack.c.l.bf16 %v550
        %v807 = vunpack.c.l.bf16 %v551
        %v808 = vunpack.c.l.bf16 %v552
        %v809 = vunpack.c.l.bf16 %v553
        %v810 = vunpack.c.l.bf16 %v554
        %v811 = vunpack.c.l.bf16 %v555
        %v812 = vunpack.c.l.bf16 %v556
        %v813 = vunpack.c.l.bf16 %v557
        %v814 = vunpack.c.l.bf16 %v558
        %v815 = vunpack.c.l.bf16 %v559
        %v816 = vunpack.c.l.bf16 %v560
        %v817 = vunpack.c.l.bf16 %v561
        %v818 = vunpack.c.l.bf16 %v562
        %v819 = vunpack.c.l.bf16 %v563
        %v820 = vunpack.c.l.bf16 %v564
        %v821 = vunpack.c.l.bf16 %v565
        %v822 = vunpack.c.l.bf16 %v566
        %v823 = vunpack.c.l.bf16 %v567
        %v824 = vunpack.c.l.bf16 %v568
        %v825 = vunpack.c.l.bf16 %v569
        %v826 = vunpack.c.l.bf16 %v570
        %v827 = vunpack.c.l.bf16 %v571
        %v828 = vunpack.c.l.bf16 %v572
        %v829 = vunpack.c.l.bf16 %v573
        %v830 = vunpack.c.l.bf16 %v574
        %v831 = vunpack.c.l.bf16 %v575
        %v832 = vunpack.c.l.bf16 %v576
        %v833 = vunpack.c.l.bf16 %v577
        %v834 = vunpack.c.l.bf16 %v578
        %v835 = vunpack.c.l.bf16 %v579
        %v836 = vunpack.c.l.bf16 %v580
        %v837 = vunpack.c.l.bf16 %v581
        %v838 = vunpack.c.l.bf16 %v582
        %v839 = vunpack.c.l.bf16 %v583
        %v840 = vunpack.c.l.bf16 %v584
        %v841 = vunpack.c.l.bf16 %v585
        %v842 = vunpack.c.l.bf16 %v586
        %v843 = vunpack.c.l.bf16 %v587
        %v844 = vunpack.c.l.bf16 %v588
        %v845 = vunpack.c.l.bf16 %v589
        %v846 = vunpack.c.l.bf16 %v590
        %v847 = vunpack.c.l.bf16 %v591
        %v848 = vunpack.c.l.bf16 %v592
        %v849 = vunpack.c.l.bf16 %v593
        %v850 = vunpack.c.l.bf16 %v594
        %v851 = vunpack.c.l.bf16 %v595
        %v852 = vunpack.c.l.bf16 %v596
        %v853 = vunpack.c.l.bf16 %v597
        %v854 = vunpack.c.l.bf16 %v598
        %v855 = vunpack.c.l.bf16 %v599
        %v856 = vunpack.c.l.bf16 %v600
        %v857 = vunpack.c.l.bf16 %v601
        %v858 = vunpack.c.l.bf16 %v602
        %v859 = vunpack.c.l.bf16 %v603
        %v860 = vunpack.c.l.bf16 %v604
        %v861 = vunpack.c.l.bf16 %v605
        %v862 = vunpack.c.l.bf16 %v606
        %v863 = vunpack.c.l.bf16 %v607
        %v864 = vunpack.c.l.bf16 %v608
        %v865 = vunpack.c.l.bf16 %v609
        %v866 = vunpack.c.l.bf16 %v610
        %v867 = vunpack.c.l.bf16 %v611
        %v868 = vunpack.c.l.bf16 %v612
        %v869 = vunpack.c.l.bf16 %v613
        %v870 = vunpack.c.l.bf16 %v614
        %v871 = vunpack.c.l.bf16 %v615
        %v872 = vunpack.c.l.bf16 %v616
        %v873 = vunpack.c.l.bf16 %v617
        %v874 = vunpack.c.l.bf16 %v618
        %v875 = vunpack.c.l.bf16 %v619
        %v876 = vunpack.c.l.bf16 %v620
        %v877 = vunpack.c.l.bf16 %v621
        %v878 = vunpack.c.l.bf16 %v622
        %v879 = vunpack.c.l.bf16 %v623
        %v880 = vunpack.c.l.bf16 %v624
        %v881 = vunpack.c.l.bf16 %v625
        %v882 = vunpack.c.l.bf16 %v626
        %v883 = vunpack.c.l.bf16 %v627
        %v884 = vunpack.c.l.bf16 %v628
        %v885 = vunpack.c.l.bf16 %v629
        %v886 = vlaneseq
        %v887 = vshrl.u32 %v886, 7
        %v888 = vsub.s32 0, %v887
        %v889 = vrot.slane %v348, %v888
        %v890 = vlaneseq
        %v891 = vshrl.u32 %v890, 7
        %v892 = vsub.s32 1, %v891
        %v893 = vrot.slane %v348, %v892
        %896 = vmatprep.subr.mxu0 0.0
        %897 = vmatpush1.msra.mxu0 %v630
        %898 = vmatprep.subr.mxu0 0.0
        %899 = vmatpush1.msra.mxu0 %v631
        %900 = vmatprep.subr.mxu0 0.0
        %901 = vmatpush1.msra.mxu0 %v632
        %902 = vmatprep.subr.mxu0 0.0
        %903 = vmatpush1.msra.mxu0 %v633
        %904 = vmatprep.subr.mxu0 0.0
        %905 = vmatpush1.msra.mxu0 %v634
        %906 = vmatprep.subr.mxu0 0.0
        %907 = vmatpush1.msra.mxu0 %v635
        %908 = vmatprep.subr.mxu0 0.0
        %909 = vmatpush1.msra.mxu0 %v636
        %910 = vmatprep.subr.mxu0 0.0
        %911 = vmatpush1.msra.mxu0 %v637
        %912 = vmatprep.subr.mxu0 0.0
        %913 = vmatpush1.msra.mxu0 %v638
        %914 = vmatprep.subr.mxu0 0.0
        %915 = vmatpush1.msra.mxu0 %v639
        %916 = vmatprep.subr.mxu0 0.0
        %917 = vmatpush1.msra.mxu0 %v640
        %918 = vmatprep.subr.mxu0 0.0
        %919 = vmatpush1.msra.mxu0 %v641
        %920 = vmatprep.subr.mxu0 0.0
        %921 = vmatpush1.msra.mxu0 %v642
        %922 = vmatprep.subr.mxu0 0.0
        %923 = vmatpush1.msra.mxu0 %v643
        %924 = vmatprep.subr.mxu0 0.0
        %925 = vmatpush1.msra.mxu0 %v644
        %926 = vmatprep.subr.mxu0 0.0
        %927 = vmatpush1.msra.mxu0 %v645
        %928 = vmatprep.subr.mxu0 0.0
        %929 = vmatpush1.msra.mxu0 %v646
        %930 = vmatprep.subr.mxu0 0.0
        %931 = vmatpush1.msra.mxu0 %v647
        %932 = vmatprep.subr.mxu0 0.0
        %933 = vmatpush1.msra.mxu0 %v648
        %934 = vmatprep.subr.mxu0 0.0
        %935 = vmatpush1.msra.mxu0 %v649
        %936 = vmatprep.subr.mxu0 0.0
        %937 = vmatpush1.msra.mxu0 %v650
        %938 = vmatprep.subr.mxu0 0.0
        %939 = vmatpush1.msra.mxu0 %v651
        %940 = vmatprep.subr.mxu0 0.0
        %941 = vmatpush1.msra.mxu0 %v652
        %942 = vmatprep.subr.mxu0 0.0
        %943 = vmatpush1.msra.mxu0 %v653
        %944 = vmatprep.subr.mxu0 0.0
        %945 = vmatpush1.msra.mxu0 %v654
        %946 = vmatprep.subr.mxu0 0.0
        %947 = vmatpush1.msra.mxu0 %v655
        %948 = vmatprep.subr.mxu0 0.0
        %949 = vmatpush1.msra.mxu0 %v656
        %950 = vmatprep.subr.mxu0 0.0
        %951 = vmatpush1.msra.mxu0 %v657
        %952 = vmatprep.subr.mxu0 0.0
        %953 = vmatpush1.msra.mxu0 %v658
        %954 = vmatprep.subr.mxu0 0.0
        %955 = vmatpush1.msra.mxu0 %v659
        %956 = vmatprep.subr.mxu0 0.0
        %957 = vmatpush1.msra.mxu0 %v660
        %958 = vmatprep.subr.mxu0 0.0
        %959 = vmatpush1.msra.mxu0 %v661
        %960 = vmatprep.mubr.f32.mxu0 %v893
        %961 = vmatmul.mubr.f32.gmra.mrb[0].mxu0 %v889
        %v962 = vpop.f32.mrb[0].mxu0
        %v963 = vadd.f32 0.0, %v962
        %v964 = vpop.f32.mrb[0].mxu0
        %965 = vdwg.mxu0
        %v966 = vlaneseq
        %v967 = vshrl.u32 %v966, 7
        %v968 = vsub.s32 0, %v967
        %v969 = vrot.slane %v362, %v968
        %v970 = vlaneseq
        %v971 = vshrl.u32 %v970, 7
        %v972 = vsub.s32 1, %v971
        %v973 = vrot.slane %v362, %v972
        %976 = vmatprep.subr.mxu0 0.0
        %977 = vmatpush1.msra.mxu0 %v662
        %978 = vmatprep.subr.mxu0 0.0
        %979 = vmatpush1.msra.mxu0 %v663
        %980 = vmatprep.subr.mxu0 0.0
        %981 = vmatpush1.msra.mxu0 %v664
        %982 = vmatprep.subr.mxu0 0.0
        %983 = vmatpush1.msra.mxu0 %v665
        %984 = vmatprep.subr.mxu0 0.0
        %985 = vmatpush1.msra.mxu0 %v666
        %986 = vmatprep.subr.mxu0 0.0
        %987 = vmatpush1.msra.mxu0 %v667
        %988 = vmatprep.subr.mxu0 0.0
        %989 = vmatpush1.msra.mxu0 %v668
        %990 = vmatprep.subr.mxu0 0.0
        %991 = vmatpush1.msra.mxu0 %v669
        %992 = vmatprep.subr.mxu0 0.0
        %993 = vmatpush1.msra.mxu0 %v670
        %994 = vmatprep.subr.mxu0 0.0
        %995 = vmatpush1.msra.mxu0 %v671
        %996 = vmatprep.subr.mxu0 0.0
        %997 = vmatpush1.msra.mxu0 %v672
        %998 = vmatprep.subr.mxu0 0.0
        %999 = vmatpush1.msra.mxu0 %v673
        %1000 = vmatprep.subr.mxu0 0.0
        %1001 = vmatpush1.msra.mxu0 %v674
        %1002 = vmatprep.subr.mxu0 0.0
        %1003 = vmatpush1.msra.mxu0 %v675
        %1004 = vmatprep.subr.mxu0 0.0
        %1005 = vmatpush1.msra.mxu0 %v676
        %1006 = vmatprep.subr.mxu0 0.0
        %1007 = vmatpush1.msra.mxu0 %v677
        %1008 = vmatprep.subr.mxu0 0.0
        %1009 = vmatpush1.msra.mxu0 %v678
        %1010 = vmatprep.subr.mxu0 0.0
        %1011 = vmatpush1.msra.mxu0 %v679
        %1012 = vmatprep.subr.mxu0 0.0
        %1013 = vmatpush1.msra.mxu0 %v680
        %1014 = vmatprep.subr.mxu0 0.0
        %1015 = vmatpush1.msra.mxu0 %v681
        %1016 = vmatprep.subr.mxu0 0.0
        %1017 = vmatpush1.msra.mxu0 %v682
        %1018 = vmatprep.subr.mxu0 0.0
        %1019 = vmatpush1.msra.mxu0 %v683
        %1020 = vmatprep.subr.mxu0 0.0
        %1021 = vmatpush1.msra.mxu0 %v684
        %1022 = vmatprep.subr.mxu0 0.0
        %1023 = vmatpush1.msra.mxu0 %v685
        %1024 = vmatprep.subr.mxu0 0.0
        %1025 = vmatpush1.msra.mxu0 %v686
        %1026 = vmatprep.subr.mxu0 0.0
        %1027 = vmatpush1.msra.mxu0 %v687
        %1028 = vmatprep.subr.mxu0 0.0
        %1029 = vmatpush1.msra.mxu0 %v688
        %1030 = vmatprep.subr.mxu0 0.0
        %1031 = vmatpush1.msra.mxu0 %v689
        %1032 = vmatprep.subr.mxu0 0.0
        %1033 = vmatpush1.msra.mxu0 %v690
        %1034 = vmatprep.subr.mxu0 0.0
        %1035 = vmatpush1.msra.mxu0 %v691
        %1036 = vmatprep.subr.mxu0 0.0
        %1037 = vmatpush1.msra.mxu0 %v692
        %1038 = vmatprep.subr.mxu0 0.0
        %1039 = vmatpush1.msra.mxu0 %v693
        %1040 = vmatprep.mubr.f32.mxu0 %v973
        %1041 = vmatmul.mubr.f32.gmra.mrb[0].mxu0 %v969
        %v1042 = vpop.f32.mrb[0].mxu0
        %v1043 = vadd.f32 0.0, %v1042
        %v1044 = vpop.f32.mrb[0].mxu0
        %1045 = vdwg.mxu0
        %v1046 = vlaneseq
        %v1047 = vshrl.u32 %v1046, 7
        %v1048 = vsub.s32 0, %v1047
        %v1049 = vrot.slane %v370, %v1048
        %v1050 = vlaneseq
        %v1051 = vshrl.u32 %v1050, 7
        %v1052 = vsub.s32 1, %v1051
        %v1053 = vrot.slane %v370, %v1052
        %1056 = vmatprep.subr.mxu0 0.0
        %1057 = vmatpush1.msra.mxu0 %v694
        %1058 = vmatprep.subr.mxu0 0.0
        %1059 = vmatpush1.msra.mxu0 %v695
        %1060 = vmatprep.subr.mxu0 0.0
        %1061 = vmatpush1.msra.mxu0 %v696
        %1062 = vmatprep.subr.mxu0 0.0
        %1063 = vmatpush1.msra.mxu0 %v697
        %1064 = vmatprep.subr.mxu0 0.0
        %1065 = vmatpush1.msra.mxu0 %v698
        %1066 = vmatprep.subr.mxu0 0.0
        %1067 = vmatpush1.msra.mxu0 %v699
        %1068 = vmatprep.subr.mxu0 0.0
        %1069 = vmatpush1.msra.mxu0 %v700
        %1070 = vmatprep.subr.mxu0 0.0
        %1071 = vmatpush1.msra.mxu0 %v701
        %1072 = vmatprep.subr.mxu0 0.0
        %1073 = vmatpush1.msra.mxu0 %v702
        %1074 = vmatprep.subr.mxu0 0.0
        %1075 = vmatpush1.msra.mxu0 %v703
        %1076 = vmatprep.subr.mxu0 0.0
        %1077 = vmatpush1.msra.mxu0 %v704
        %1078 = vmatprep.subr.mxu0 0.0
        %1079 = vmatpush1.msra.mxu0 %v705
        %1080 = vmatprep.subr.mxu0 0.0
        %1081 = vmatpush1.msra.mxu0 %v706
        %1082 = vmatprep.subr.mxu0 0.0
        %1083 = vmatpush1.msra.mxu0 %v707
        %1084 = vmatprep.subr.mxu0 0.0
        %1085 = vmatpush1.msra.mxu0 %v708
        %1086 = vmatprep.subr.mxu0 0.0
        %1087 = vmatpush1.msra.mxu0 %v709
        %1088 = vmatprep.subr.mxu0 0.0
        %1089 = vmatpush1.msra.mxu0 %v710
        %1090 = vmatprep.subr.mxu0 0.0
        %1091 = vmatpush1.msra.mxu0 %v711
        %1092 = vmatprep.subr.mxu0 0.0
        %1093 = vmatpush1.msra.mxu0 %v712
        %1094 = vmatprep.subr.mxu0 0.0
        %1095 = vmatpush1.msra.mxu0 %v713
        %1096 = vmatprep.subr.mxu0 0.0
        %1097 = vmatpush1.msra.mxu0 %v714
        %1098 = vmatprep.subr.mxu0 0.0
        %1099 = vmatpush1.msra.mxu0 %v715
        %1100 = vmatprep.subr.mxu0 0.0
        %1101 = vmatpush1.msra.mxu0 %v716
        %1102 = vmatprep.subr.mxu0 0.0
        %1103 = vmatpush1.msra.mxu0 %v717
        %1104 = vmatprep.subr.mxu0 0.0
        %1105 = vmatpush1.msra.mxu0 %v718
        %1106 = vmatprep.subr.mxu0 0.0
        %1107 = vmatpush1.msra.mxu0 %v719
        %1108 = vmatprep.subr.mxu0 0.0
        %1109 = vmatpush1.msra.mxu0 %v720
        %1110 = vmatprep.subr.mxu0 0.0
        %1111 = vmatpush1.msra.mxu0 %v721
        %1112 = vmatprep.subr.mxu0 0.0
        %1113 = vmatpush1.msra.mxu0 %v722
        %1114 = vmatprep.subr.mxu0 0.0
        %1115 = vmatpush1.msra.mxu0 %v723
        %1116 = vmatprep.subr.mxu0 0.0
        %1117 = vmatpush1.msra.mxu0 %v724
        %1118 = vmatprep.subr.mxu0 0.0
        %1119 = vmatpush1.msra.mxu0 %v725
        %1120 = vmatprep.mubr.f32.mxu0 %v1053
        %1121 = vmatmul.mubr.f32.gmra.mrb[0].mxu0 %v1049
        %v1122 = vpop.f32.mrb[0].mxu0
        %v1123 = vadd.f32 0.0, %v1122
        %v1124 = vpop.f32.mrb[0].mxu0
        %1125 = vdwg.mxu0
        %v1126 = vlaneseq
        %v1127 = vshrl.u32 %v1126, 7
        %v1128 = vsub.s32 0, %v1127
        %v1129 = vrot.slane %v372, %v1128
        %v1130 = vlaneseq
        %v1131 = vshrl.u32 %v1130, 7
        %v1132 = vsub.s32 1, %v1131
        %v1133 = vrot.slane %v372, %v1132
        %1136 = vmatprep.subr.mxu0 0.0
        %1137 = vmatpush1.msra.mxu0 %v726
        %1138 = vmatprep.subr.mxu0 0.0
        %1139 = vmatpush1.msra.mxu0 %v727
        %1140 = vmatprep.subr.mxu0 0.0
        %1141 = vmatpush1.msra.mxu0 %v728
        %1142 = vmatprep.subr.mxu0 0.0
        %1143 = vmatpush1.msra.mxu0 %v729
        %1144 = vmatprep.subr.mxu0 0.0
        %1145 = vmatpush1.msra.mxu0 %v730
        %1146 = vmatprep.subr.mxu0 0.0
        %1147 = vmatpush1.msra.mxu0 %v731
        %1148 = vmatprep.subr.mxu0 0.0
        %1149 = vmatpush1.msra.mxu0 %v732
        %1150 = vmatprep.subr.mxu0 0.0
        %1151 = vmatpush1.msra.mxu0 %v733
        %1152 = vmatprep.subr.mxu0 0.0
        %1153 = vmatpush1.msra.mxu0 %v734
        %1154 = vmatprep.subr.mxu0 0.0
        %1155 = vmatpush1.msra.mxu0 %v735
        %1156 = vmatprep.subr.mxu0 0.0
        %1157 = vmatpush1.msra.mxu0 %v736
        %1158 = vmatprep.subr.mxu0 0.0
        %1159 = vmatpush1.msra.mxu0 %v737
        %1160 = vmatprep.subr.mxu0 0.0
        %1161 = vmatpush1.msra.mxu0 %v738
        %1162 = vmatprep.subr.mxu0 0.0
        %1163 = vmatpush1.msra.mxu0 %v739
        %1164 = vmatprep.subr.mxu0 0.0
        %1165 = vmatpush1.msra.mxu0 %v740
        %1166 = vmatprep.subr.mxu0 0.0
        %1167 = vmatpush1.msra.mxu0 %v741
        %1168 = vmatprep.subr.mxu0 0.0
        %1169 = vmatpush1.msra.mxu0 %v742
        %1170 = vmatprep.subr.mxu0 0.0
        %1171 = vmatpush1.msra.mxu0 %v743
        %1172 = vmatprep.subr.mxu0 0.0
        %1173 = vmatpush1.msra.mxu0 %v744
        %1174 = vmatprep.subr.mxu0 0.0
        %1175 = vmatpush1.msra.mxu0 %v745
        %1176 = vmatprep.subr.mxu0 0.0
        %1177 = vmatpush1.msra.mxu0 %v746
        %1178 = vmatprep.subr.mxu0 0.0
        %1179 = vmatpush1.msra.mxu0 %v747
        %1180 = vmatprep.subr.mxu0 0.0
        %1181 = vmatpush1.msra.mxu0 %v748
        %1182 = vmatprep.subr.mxu0 0.0
        %1183 = vmatpush1.msra.mxu0 %v749
        %1184 = vmatprep.subr.mxu0 0.0
        %1185 = vmatpush1.msra.mxu0 %v750
        %1186 = vmatprep.subr.mxu0 0.0
        %1187 = vmatpush1.msra.mxu0 %v751
        %1188 = vmatprep.subr.mxu0 0.0
        %1189 = vmatpush1.msra.mxu0 %v752
        %1190 = vmatprep.subr.mxu0 0.0
        %1191 = vmatpush1.msra.mxu0 %v753
        %1192 = vmatprep.subr.mxu0 0.0
        %1193 = vmatpush1.msra.mxu0 %v754
        %1194 = vmatprep.subr.mxu0 0.0
        %1195 = vmatpush1.msra.mxu0 %v755
        %1196 = vmatprep.subr.mxu0 0.0
        %1197 = vmatpush1.msra.mxu0 %v756
        %1198 = vmatprep.subr.mxu0 0.0
        %1199 = vmatpush1.msra.mxu0 %v757
        %1200 = vmatprep.mubr.f32.mxu0 %v1133
        %1201 = vmatmul.mubr.f32.gmra.mrb[0].mxu0 %v1129
        %v1202 = vpop.f32.mrb[0].mxu0
        %v1203 = vadd.f32 0.0, %v1202
        %v1204 = vpop.f32.mrb[0].mxu0
        %1205 = vdwg.mxu0
        %v1206 = vlaneseq
        %v1207 = vshrl.u32 %v1206, 7
        %v1208 = vsub.s32 0, %v1207
        %v1209 = vrot.slane %v355, %v1208
        %v1210 = vlaneseq
        %v1211 = vshrl.u32 %v1210, 7
        %v1212 = vsub.s32 1, %v1211
        %v1213 = vrot.slane %v355, %v1212
        %1216 = vmatprep.subr.mxu0 0.0
        %1217 = vmatpush1.msra.mxu0 %v758
        %1218 = vmatprep.subr.mxu0 0.0
        %1219 = vmatpush1.msra.mxu0 %v759
        %1220 = vmatprep.subr.mxu0 0.0
        %1221 = vmatpush1.msra.mxu0 %v760
        %1222 = vmatprep.subr.mxu0 0.0
        %1223 = vmatpush1.msra.mxu0 %v761
        %1224 = vmatprep.subr.mxu0 0.0
        %1225 = vmatpush1.msra.mxu0 %v762
        %1226 = vmatprep.subr.mxu0 0.0
        %1227 = vmatpush1.msra.mxu0 %v763
        %1228 = vmatprep.subr.mxu0 0.0
        %1229 = vmatpush1.msra.mxu0 %v764
        %1230 = vmatprep.subr.mxu0 0.0
        %1231 = vmatpush1.msra.mxu0 %v765
        %1232 = vmatprep.subr.mxu0 0.0
        %1233 = vmatpush1.msra.mxu0 %v766
        %1234 = vmatprep.subr.mxu0 0.0
        %1235 = vmatpush1.msra.mxu0 %v767
        %1236 = vmatprep.subr.mxu0 0.0
        %1237 = vmatpush1.msra.mxu0 %v768
        %1238 = vmatprep.subr.mxu0 0.0
        %1239 = vmatpush1.msra.mxu0 %v769
        %1240 = vmatprep.subr.mxu0 0.0
        %1241 = vmatpush1.msra.mxu0 %v770
        %1242 = vmatprep.subr.mxu0 0.0
        %1243 = vmatpush1.msra.mxu0 %v771
        %1244 = vmatprep.subr.mxu0 0.0
        %1245 = vmatpush1.msra.mxu0 %v772
        %1246 = vmatprep.subr.mxu0 0.0
        %1247 = vmatpush1.msra.mxu0 %v773
        %1248 = vmatprep.subr.mxu0 0.0
        %1249 = vmatpush1.msra.mxu0 %v774
        %1250 = vmatprep.subr.mxu0 0.0
        %1251 = vmatpush1.msra.mxu0 %v775
        %1252 = vmatprep.subr.mxu0 0.0
        %1253 = vmatpush1.msra.mxu0 %v776
        %1254 = vmatprep.subr.mxu0 0.0
        %1255 = vmatpush1.msra.mxu0 %v777
        %1256 = vmatprep.subr.mxu0 0.0
        %1257 = vmatpush1.msra.mxu0 %v778
        %1258 = vmatprep.subr.mxu0 0.0
        %1259 = vmatpush1.msra.mxu0 %v779
        %1260 = vmatprep.subr.mxu0 0.0
        %1261 = vmatpush1.msra.mxu0 %v780
        %1262 = vmatprep.subr.mxu0 0.0
        %1263 = vmatpush1.msra.mxu0 %v781
        %1264 = vmatprep.subr.mxu0 0.0
        %1265 = vmatpush1.msra.mxu0 %v782
        %1266 = vmatprep.subr.mxu0 0.0
        %1267 = vmatpush1.msra.mxu0 %v783
        %1268 = vmatprep.subr.mxu0 0.0
        %1269 = vmatpush1.msra.mxu0 %v784
        %1270 = vmatprep.subr.mxu0 0.0
        %1271 = vmatpush1.msra.mxu0 %v785
        %1272 = vmatprep.subr.mxu0 0.0
        %1273 = vmatpush1.msra.mxu0 %v786
        %1274 = vmatprep.subr.mxu0 0.0
        %1275 = vmatpush1.msra.mxu0 %v787
        %1276 = vmatprep.subr.mxu0 0.0
        %1277 = vmatpush1.msra.mxu0 %v788
        %1278 = vmatprep.subr.mxu0 0.0
        %1279 = vmatpush1.msra.mxu0 %v789
        %1280 = vmatprep.mubr.f32.mxu0 %v1213
        %1281 = vmatmul.mubr.f32.gmra.mrb[0].mxu0 %v1209
        %v1282 = vpop.f32.mrb[0].mxu0
        %v1283 = vadd.f32 0.0, %v1282
        %v1284 = vpop.f32.mrb[0].mxu0
        %1285 = vdwg.mxu0
        %v1286 = vlaneseq
        %v1287 = vshrl.u32 %v1286, 7
        %v1288 = vsub.s32 0, %v1287
        %v1289 = vrot.slane %v369, %v1288
        %v1290 = vlaneseq
        %v1291 = vshrl.u32 %v1290, 7
        %v1292 = vsub.s32 1, %v1291
        %v1293 = vrot.slane %v369, %v1292
        %1296 = vmatprep.subr.mxu0 0.0
        %1297 = vmatpush1.msra.mxu0 %v790
        %1298 = vmatprep.subr.mxu0 0.0
        %1299 = vmatpush1.msra.mxu0 %v791
        %1300 = vmatprep.subr.mxu0 0.0
        %1301 = vmatpush1.msra.mxu0 %v792
        %1302 = vmatprep.subr.mxu0 0.0
        %1303 = vmatpush1.msra.mxu0 %v793
        %1304 = vmatprep.subr.mxu0 0.0
        %1305 = vmatpush1.msra.mxu0 %v794
        %1306 = vmatprep.subr.mxu0 0.0
        %1307 = vmatpush1.msra.mxu0 %v795
        %1308 = vmatprep.subr.mxu0 0.0
        %1309 = vmatpush1.msra.mxu0 %v796
        %1310 = vmatprep.subr.mxu0 0.0
        %1311 = vmatpush1.msra.mxu0 %v797
        %1312 = vmatprep.subr.mxu0 0.0
        %1313 = vmatpush1.msra.mxu0 %v798
        %1314 = vmatprep.subr.mxu0 0.0
        %1315 = vmatpush1.msra.mxu0 %v799
        %1316 = vmatprep.subr.mxu0 0.0
        %1317 = vmatpush1.msra.mxu0 %v800
        %1318 = vmatprep.subr.mxu0 0.0
        %1319 = vmatpush1.msra.mxu0 %v801
        %1320 = vmatprep.subr.mxu0 0.0
        %1321 = vmatpush1.msra.mxu0 %v802
        %1322 = vmatprep.subr.mxu0 0.0
        %1323 = vmatpush1.msra.mxu0 %v803
        %1324 = vmatprep.subr.mxu0 0.0
        %1325 = vmatpush1.msra.mxu0 %v804
        %1326 = vmatprep.subr.mxu0 0.0
        %1327 = vmatpush1.msra.mxu0 %v805
        %1328 = vmatprep.subr.mxu0 0.0
        %1329 = vmatpush1.msra.mxu0 %v806
        %1330 = vmatprep.subr.mxu0 0.0
        %1331 = vmatpush1.msra.mxu0 %v807
        %1332 = vmatprep.subr.mxu0 0.0
        %1333 = vmatpush1.msra.mxu0 %v808
        %1334 = vmatprep.subr.mxu0 0.0
        %1335 = vmatpush1.msra.mxu0 %v809
        %1336 = vmatprep.subr.mxu0 0.0
        %1337 = vmatpush1.msra.mxu0 %v810
        %1338 = vmatprep.subr.mxu0 0.0
        %1339 = vmatpush1.msra.mxu0 %v811
        %1340 = vmatprep.subr.mxu0 0.0
        %1341 = vmatpush1.msra.mxu0 %v812
        %1342 = vmatprep.subr.mxu0 0.0
        %1343 = vmatpush1.msra.mxu0 %v813
        %1344 = vmatprep.subr.mxu0 0.0
        %1345 = vmatpush1.msra.mxu0 %v814
        %1346 = vmatprep.subr.mxu0 0.0
        %1347 = vmatpush1.msra.mxu0 %v815
        %1348 = vmatprep.subr.mxu0 0.0
        %1349 = vmatpush1.msra.mxu0 %v816
        %1350 = vmatprep.subr.mxu0 0.0
        %1351 = vmatpush1.msra.mxu0 %v817
        %1352 = vmatprep.subr.mxu0 0.0
        %1353 = vmatpush1.msra.mxu0 %v818
        %1354 = vmatprep.subr.mxu0 0.0
        %1355 = vmatpush1.msra.mxu0 %v819
        %1356 = vmatprep.subr.mxu0 0.0
        %1357 = vmatpush1.msra.mxu0 %v820
        %1358 = vmatprep.subr.mxu0 0.0
        %1359 = vmatpush1.msra.mxu0 %v821
        %1360 = vmatprep.mubr.f32.mxu0 %v1293
        %1361 = vmatmul.mubr.f32.gmra.mrb[0].mxu0 %v1289
        %v1362 = vpop.f32.mrb[0].mxu0
        %v1363 = vadd.f32 0.0, %v1362
        %v1364 = vpop.f32.mrb[0].mxu0
        %1365 = vdwg.mxu0
        %v1366 = vlaneseq
        %v1367 = vshrl.u32 %v1366, 7
        %v1368 = vsub.s32 0, %v1367
        %v1369 = vrot.slane %v371, %v1368
        %v1370 = vlaneseq
        %v1371 = vshrl.u32 %v1370, 7
        %v1372 = vsub.s32 1, %v1371
        %v1373 = vrot.slane %v371, %v1372
        %1376 = vmatprep.subr.mxu0 0.0
        %1377 = vmatpush1.msra.mxu0 %v822
        %1378 = vmatprep.subr.mxu0 0.0
        %1379 = vmatpush1.msra.mxu0 %v823
        %1380 = vmatprep.subr.mxu0 0.0
        %1381 = vmatpush1.msra.mxu0 %v824
        %1382 = vmatprep.subr.mxu0 0.0
        %1383 = vmatpush1.msra.mxu0 %v825
        %1384 = vmatprep.subr.mxu0 0.0
        %1385 = vmatpush1.msra.mxu0 %v826
        %1386 = vmatprep.subr.mxu0 0.0
        %1387 = vmatpush1.msra.mxu0 %v827
        %1388 = vmatprep.subr.mxu0 0.0
        %1389 = vmatpush1.msra.mxu0 %v828
        %1390 = vmatprep.subr.mxu0 0.0
        %1391 = vmatpush1.msra.mxu0 %v829
        %1392 = vmatprep.subr.mxu0 0.0
        %1393 = vmatpush1.msra.mxu0 %v830
        %1394 = vmatprep.subr.mxu0 0.0
        %1395 = vmatpush1.msra.mxu0 %v831
        %1396 = vmatprep.subr.mxu0 0.0
        %1397 = vmatpush1.msra.mxu0 %v832
        %1398 = vmatprep.subr.mxu0 0.0
        %1399 = vmatpush1.msra.mxu0 %v833
        %1400 = vmatprep.subr.mxu0 0.0
        %1401 = vmatpush1.msra.mxu0 %v834
        %1402 = vmatprep.subr.mxu0 0.0
        %1403 = vmatpush1.msra.mxu0 %v835
        %1404 = vmatprep.subr.mxu0 0.0
        %1405 = vmatpush1.msra.mxu0 %v836
        %1406 = vmatprep.subr.mxu0 0.0
        %1407 = vmatpush1.msra.mxu0 %v837
        %1408 = vmatprep.subr.mxu0 0.0
        %1409 = vmatpush1.msra.mxu0 %v838
        %1410 = vmatprep.subr.mxu0 0.0
        %1411 = vmatpush1.msra.mxu0 %v839
        %1412 = vmatprep.subr.mxu0 0.0
        %1413 = vmatpush1.msra.mxu0 %v840
        %1414 = vmatprep.subr.mxu0 0.0
        %1415 = vmatpush1.msra.mxu0 %v841
        %1416 = vmatprep.subr.mxu0 0.0
        %1417 = vmatpush1.msra.mxu0 %v842
        %1418 = vmatprep.subr.mxu0 0.0
        %1419 = vmatpush1.msra.mxu0 %v843
        %1420 = vmatprep.subr.mxu0 0.0
        %1421 = vmatpush1.msra.mxu0 %v844
        %1422 = vmatprep.subr.mxu0 0.0
        %1423 = vmatpush1.msra.mxu0 %v845
        %1424 = vmatprep.subr.mxu0 0.0
        %1425 = vmatpush1.msra.mxu0 %v846
        %1426 = vmatprep.subr.mxu0 0.0
        %1427 = vmatpush1.msra.mxu0 %v847
        %1428 = vmatprep.subr.mxu0 0.0
        %1429 = vmatpush1.msra.mxu0 %v848
        %1430 = vmatprep.subr.mxu0 0.0
        %1431 = vmatpush1.msra.mxu0 %v849
        %1432 = vmatprep.subr.mxu0 0.0
        %1433 = vmatpush1.msra.mxu0 %v850
        %1434 = vmatprep.subr.mxu0 0.0
        %1435 = vmatpush1.msra.mxu0 %v851
        %1436 = vmatprep.subr.mxu0 0.0
        %1437 = vmatpush1.msra.mxu0 %v852
        %1438 = vmatprep.subr.mxu0 0.0
        %1439 = vmatpush1.msra.mxu0 %v853
        %1440 = vmatprep.mubr.f32.mxu0 %v1373
        %1441 = vmatmul.mubr.f32.gmra.mrb[0].mxu0 %v1369
        %v1442 = vpop.f32.mrb[0].mxu0
        %v1443 = vadd.f32 0.0, %v1442
        %v1444 = vpop.f32.mrb[0].mxu0
        %1445 = vdwg.mxu0
        %v1446 = vlaneseq
        %v1447 = vshrl.u32 %v1446, 7
        %v1448 = vsub.s32 0, %v1447
        %v1449 = vrot.slane %v373, %v1448
        %v1450 = vlaneseq
        %v1451 = vshrl.u32 %v1450, 7
        %v1452 = vsub.s32 1, %v1451
        %v1453 = vrot.slane %v373, %v1452
        %1456 = vmatprep.subr.mxu0 0.0
        %1457 = vmatpush1.msra.mxu0 %v854
        %1458 = vmatprep.subr.mxu0 0.0
        %1459 = vmatpush1.msra.mxu0 %v855
        %1460 = vmatprep.subr.mxu0 0.0
        %1461 = vmatpush1.msra.mxu0 %v856
        %1462 = vmatprep.subr.mxu0 0.0
        %1463 = vmatpush1.msra.mxu0 %v857
        %1464 = vmatprep.subr.mxu0 0.0
        %1465 = vmatpush1.msra.mxu0 %v858
        %1466 = vmatprep.subr.mxu0 0.0
        %1467 = vmatpush1.msra.mxu0 %v859
        %1468 = vmatprep.subr.mxu0 0.0
        %1469 = vmatpush1.msra.mxu0 %v860
        %1470 = vmatprep.subr.mxu0 0.0
        %1471 = vmatpush1.msra.mxu0 %v861
        %1472 = vmatprep.subr.mxu0 0.0
        %1473 = vmatpush1.msra.mxu0 %v862
        %1474 = vmatprep.subr.mxu0 0.0
        %1475 = vmatpush1.msra.mxu0 %v863
        %1476 = vmatprep.subr.mxu0 0.0
        %1477 = vmatpush1.msra.mxu0 %v864
        %1478 = vmatprep.subr.mxu0 0.0
        %1479 = vmatpush1.msra.mxu0 %v865
        %1480 = vmatprep.subr.mxu0 0.0
        %1481 = vmatpush1.msra.mxu0 %v866
        %1482 = vmatprep.subr.mxu0 0.0
        %1483 = vmatpush1.msra.mxu0 %v867
        %1484 = vmatprep.subr.mxu0 0.0
        %1485 = vmatpush1.msra.mxu0 %v868
        %1486 = vmatprep.subr.mxu0 0.0
        %1487 = vmatpush1.msra.mxu0 %v869
        %1488 = vmatprep.subr.mxu0 0.0
        %1489 = vmatpush1.msra.mxu0 %v870
        %1490 = vmatprep.subr.mxu0 0.0
        %1491 = vmatpush1.msra.mxu0 %v871
        %1492 = vmatprep.subr.mxu0 0.0
        %1493 = vmatpush1.msra.mxu0 %v872
        %1494 = vmatprep.subr.mxu0 0.0
        %1495 = vmatpush1.msra.mxu0 %v873
        %1496 = vmatprep.subr.mxu0 0.0
        %1497 = vmatpush1.msra.mxu0 %v874
        %1498 = vmatprep.subr.mxu0 0.0
        %1499 = vmatpush1.msra.mxu0 %v875
        %1500 = vmatprep.subr.mxu0 0.0
        %1501 = vmatpush1.msra.mxu0 %v876
        %1502 = vmatprep.subr.mxu0 0.0
        %1503 = vmatpush1.msra.mxu0 %v877
        %1504 = vmatprep.subr.mxu0 0.0
        %1505 = vmatpush1.msra.mxu0 %v878
        %1506 = vmatprep.subr.mxu0 0.0
        %1507 = vmatpush1.msra.mxu0 %v879
        %1508 = vmatprep.subr.mxu0 0.0
        %1509 = vmatpush1.msra.mxu0 %v880
        %1510 = vmatprep.subr.mxu0 0.0
        %1511 = vmatpush1.msra.mxu0 %v881
        %1512 = vmatprep.subr.mxu0 0.0
        %1513 = vmatpush1.msra.mxu0 %v882
        %1514 = vmatprep.subr.mxu0 0.0
        %1515 = vmatpush1.msra.mxu0 %v883
        %1516 = vmatprep.subr.mxu0 0.0
        %1517 = vmatpush1.msra.mxu0 %v884
        %1518 = vmatprep.subr.mxu0 0.0
        %1519 = vmatpush1.msra.mxu0 %v885
        %1520 = vmatprep.mubr.f32.mxu0 %v1453
        %1521 = vmatmul.mubr.f32.gmra.mrb[0].mxu0 %v1449
        %v1522 = vpop.f32.mrb[0].mxu0
        %v1523 = vadd.f32 0.0, %v1522
        %v1524 = vpop.f32.mrb[0].mxu0
        %1525 = vdwg.mxu0
        %v1526 = vld [vmem:[#allocation2] sm:$0xff]
        %v1535 = vrot.slane %v1043, 7
        %vm1536 = vcmask 1041409
        %v1537 = vsel %vm1536, %v1535, %v963
        %v1538 = vrot.slane %v1123, 6
        %vm1539 = vcmask 1042434
        %v1540 = vsel %vm1539, %v1538, %v1537
        %v1541 = vrot.slane %v1203, 5
        %vm1542 = vcmask 1043459
        %v1543 = vsel %vm1542, %v1541, %v1540
        %v1544 = vrot.slane %v1283, 4
        %vm1545 = vcmask 1044484
        %v1546 = vsel %vm1545, %v1544, %v1543
        %v1547 = vrot.slane %v1363, 3
        %vm1548 = vcmask 1045509
        %v1549 = vsel %vm1548, %v1547, %v1546
        %v1550 = vrot.slane %v1443, 2
        %vm1551 = vcmask 1046534
        %v1552 = vsel %vm1551, %v1550, %v1549
        %v1553 = vrot.slane %v1523, 1
        %vm1554 = vcmask 1047559
        %v1555 = vsel %vm1554, %v1553, %v1552
        %v1557 = vadd.f32 %v1526, %v1555
        %1558 = vst [vmem:[#allocation2] sm:$0xff] %v1557
        // Predicated region
        $region49: #{svuld_forward.1} parent=39 // pred_check
          %p1559 = pneg %p315
        $region50: #{svuld_forward.1} parent=39 // pred_check_branch
          %1561 = sbr.rel (%p1559) target = $region52
        $region51: #{svuld_forward.1} parent=39 // pred_region
          %v1562 = vld [vmem:[#allocation2] sm:$0xff]
          %v1563 = vld [vmem:[%s2] sm:$0x3]
          %v1564 = vld [vmem:[%s3] sm:$0x1]
          %v1565 = vlaneseq
          %v1566 = vshrl.u32 %v1565, 7
          %v1567 = vsub.s32 0, %v1566
          %v1568 = vrot.slane %v1563, %v1567
          %v1569 = vmul.f32 %v1562, %v1568
          %1570 = vadd.xlane.f32.xlu0 %v1569
          %v1571 = vpop.xlane.xlu0 %1570
          %v1573 = vlaneseq
          %v1574 = vshrl.u32 %v1573, 7
          %v1575 = vsub.s32 0, %v1574
          %v1576 = vrot.slane %v1564, %v1575
          %v1578 = vadd.f32 %v1571, %v1576
          %v1579 = vlaneseq
          %v1580 = vshrl.u32 %v1579, 7
          %v1581 = vsub.s32 1, %v1580
          %v1582 = vrot.slane %v1563, %v1581
          %v1583 = vmul.f32 %v1562, %v1582
          %1584 = vadd.xlane.f32.xlu0 %v1583
          %v1585 = vpop.xlane.xlu0 %1584
          %v1586 = vadd.f32 %v1585, %v1576
          %1588 = vrot.lane.b32.xlu0 %v1586, 127
          %v1589 = vpop.permute.xlu0 %1588
          %v1591 = vmax.f32 %v1578, %v1589
          %v1592 = vsub.f32 %v1578, %v1591
          %v1593 = vmul.f32 %v1592, 1.442695
          %v1594 = vpow.pop %v1593
          %1596 = vrot.lane.b32.xlu0 %v1591, 1
          %v1597 = vpop.permute.xlu0 %1596
          %v1599 = vsub.f32 %v1586, %v1597
          %v1600 = vmul.f32 %v1599, 1.442695
          %v1601 = vpow.pop %v1600
          %1603 = vrot.lane.b32.xlu0 %v1601, 127
          %v1604 = vpop.permute.xlu0 %1603
          %v1606 = vadd.f32 %v1594, %v1604
          %v1607 = vrcp.pop %v1606
          %v1608 = vmul.f32 %v1594, %v1607
          %1610 = vrot.lane.b32.xlu0 %v1607, 1
          %v1611 = vpop.permute.xlu0 %1610
          %v1613 = vmul.f32 %v1601, %v1611
          %v1614 = vlog2.pop %v1606
          %v1615 = vmul.f32 %v1614, 0.6931472
          %v1616 = vsub.f32 %v1592, %v1615
          %1618 = vrot.lane.b32.xlu0 %v1615, 1
          %v1619 = vpop.permute.xlu0 %1618
          %v1621 = vsub.f32 %v1599, %v1619
          %v1622 = vld [vmem:[%s310] sm:$0xff]
          %vm1623 = vcmp.eq.s32.totalorder %v1622, 0
          %1625 = vrot.lane.b32.xlu0 %v1621, 127
          %v1626 = vpop.permute.xlu0 %1625
          %v1628 = vsel %vm1623, %v1616, %v1626
          %v1629 = vsub.f32 0.0, %v1628
          %v1630 = vlaneseq
          %v1631 = vand.u32 %v1630, 127
          %vm1632 = vcmp.eq.s32.totalorder %v1631, 0
          %vm1633 = vcmp.eq.s32.totalorder %v1631, 1
          %vm1634 = vcmp.eq.s32.totalorder %v1631, 2
          %1636 = vset.pattern.permute.xlu0 1
          %1637 = vperm.xlu0 %1636, %v1613
          %v1638 = vpop.permute.xlu0 %1637
          %v1640 = vsel %vm1634, %v1638, 0.0
          %1642 = vset.pattern.permute.xlu0 0
          %1643 = vperm.xlu0 %1642, %v1608
          %v1644 = vpop.permute.xlu0 %1643
          %v1646 = vsel %vm1633, %v1644, %v1640
          %1648 = vset.pattern.permute.xlu0 0
          %1649 = vperm.xlu0 %1648, %v1629
          %v1650 = vpop.permute.xlu0 %1649
          %v1652 = vsel %vm1632, %v1650, %v1646
          %1653 = vst [vmem:[%s314] sm:$0xff] %v1652
        $region52: #{svuld_forward.1} parent=39 // pred_fallthru
          _
        %p1654 = scmp.lt.s32.totalorder %s23, 1
        %s1655 = scalar_select %p1654, %s23, 1
        %s1656 = smul.addr %s1655, 8
        %s1657 = scalar_lea.vmem %s5, %s1656
        // Predicated region
        $region53: #{svuld_forward.1} parent=39 // pred_check
          %p1658 = pneg %p173
        $region54: #{svuld_forward.1} parent=39 // pred_check_branch
          %1660 = sbr.rel (%p1658) target = $region56
        $region55: #{svuld_forward.1} parent=39 // pred_region
          _
        $region56: #{svuld_forward.1} parent=39 // pred_fallthru
          _
      $region40: #{svuld_forward.1} parent=5 // pred_fallthru
        _
      %p1661 = scmp.le.s32.totalorder 2, %s14
      // Predicated region
      $region57: #{svuld_forward.1} parent=5 // pred_check
        %p1662 = pneg %p1661
      $region58: #{svuld_forward.1} parent=5 // pred_check_branch
        %1664 = sbr.rel (%p1662) target = $region60
      $region59: #{svuld_forward.1} parent=5 // pred_region
        %s1665 = ssub.s32 %s14, 2
        // Predicated region
        $region61: #{svuld_forward.1} parent=59 // pred_check
          %p1666 = pneg %p179
        $region62: #{svuld_forward.1} parent=59 // pred_check_branch
          %1668 = sbr.rel (%p1666) target = $region64
        $region63: #{svuld_forward.1} parent=59 // pred_region
          %p1669 = scmp.lt.s32.totalorder %s25, 1
          %s1670 = scalar_select %p1669, %s25, 1
          %s1671 = smul.addr %s1670, 8
          %s1672 = scalar_lea.vmem %s5, %s1671
        $region64: #{svuld_forward.1} parent=59 // pred_fallthru
          _
      $region60: #{svuld_forward.1} parent=5 // pred_fallthru
        _
    $region6: #{svuld_forward.1} parent=1 // loop_footer
      %s18 = sadd.s32 1, %s14
    $region7: #{svuld_forward.1} parent=1 // loop_footer_branch
      %13 = sbr.rel target = $region3
    $region8: #{svuld_forward.1} parent=1 // loop_exit
      _
    %1673 = vsyncpa [#allocation4], 1
    %s1674 = scalar_lea.sflag [#allocation4], 1
    %1675 = vsyncpa %s1674, 1

</llo_original>
